<compile_context>
chip_gen: v6e
topology: v6e:2x2x1
jax: 0.10.0
libtpu: 0.0.40
codegen_flags: <defaults>
</compile_context>

<pallas_src>
import numpy as np
import jax
import jax.numpy as jnp
from jax.experimental import pallas as pl
from jax.experimental.pallas import tpu as pltpu


# ---------------------------------------------------------------------------
# numpy mask construction (used only by the plain-JAX reference; the kernel
# rebuilds identical masks from iota, so no K*K mask DMA per call)
# ---------------------------------------------------------------------------
def get_mask_neg(num_transforms, batch_size):
    K = num_transforms * batch_size
    mask = np.zeros((K, K), dtype=np.int64)
    for n in range(num_transforms - 1):
        ones = np.ones(K - batch_size * (n + 1))
        mask += np.diag(ones, (n + 1) * batch_size).astype(np.int64)
        mask += np.diag(ones, -(n + 1) * batch_size).astype(np.int64)
    mask = np.logical_not(mask)
    np.fill_diagonal(mask, 0)
    return mask.astype(bool)


def get_mask_pos(mask_neg):
    mask = np.logical_not(mask_neg)
    np.fill_diagonal(mask, 0)
    return mask.astype(bool)


# ---------------------------------------------------------------------------
# fused Pallas kernel: encoder -> projector/NT-Xent -> decoder/MSE -> scalar
# ---------------------------------------------------------------------------
def build_denoising_loss(N, BS, F, D, P, temperature, h_weight, tile_f=None):
    K = N * BS
    Kpos = N * (N - 1) * BS
    inv_T = 1.0 / temperature

    # lane-dense F tile (>=512 preferred so DMA overhead amortizes and stores are
    # unmasked); fall back to whole-F if F is not a multiple of 128.
    if tile_f is None:
        tile_f = next((t for t in (512, 256, 128) if F % t == 0), F)
    TF = tile_f
    assert F % TF == 0
    nF = F // TF

    def kernel(x_ref, we_ref, be_ref, wp_ref, bp_ref, wd_ref, bd_ref,
               out_ref, h_acc, hb_scr, sm_scr):
        p = pl.program_id(0)            # 0: encoder contraction pass, 1: head pass
        j = pl.program_id(1)            # F-tile index
        last_j = pl.num_programs(1) - 1

        # ---------------- phase 0: encoder  h += x[:, ft] @ we[ft, :] -------------
        @pl.when(jnp.logical_and(p == 0, j == 0))
        def _():
            h_acc[...] = jnp.zeros_like(h_acc)

        @pl.when(p == 0)
        def _():
            xb = x_ref[...].astype(jnp.bfloat16)        # per-tile cast (VPU filler)
            h_acc[...] += jnp.dot(xb, we_ref[...],
                                  preferred_element_type=jnp.float32)

        # ---------------- phase 1 / first step: projector + NT-Xent ---------------
        @pl.when(jnp.logical_and(p == 1, j == 0))
        def _():
            h = h_acc[...] + be_ref[...]                 # finalize encoder bias
            hb_scr[...] = h.astype(jnp.bfloat16)

            z = jnp.dot(hb_scr[...], wp_ref[...],
                        preferred_element_type=jnp.float32) + bp_ref[...]   # [K,P]
            # cosine similarity; torch CosineSimilarity eps=1e-8 clamp on the norm
            inv_norm = jax.lax.rsqrt(
                jnp.maximum(jnp.sum(z * z, axis=-1, keepdims=True), 1e-16))
            zn = z * inv_norm
            simmat = jax.lax.dot_general(
                zn, zn, (((1,), (1,)), ((), ())),
                preferred_element_type=jnp.float32) * inv_T                 # [K,K]

            # masks from iota:  same-image group  <=>  (i % BS) == (j % BS).
            # The unrolled compare form below is equivalent; it is kept because it is
            # guaranteed to lower on every TPU generation (vector integer mod is not),
            # and N is tiny for this module.
            ri = jax.lax.broadcasted_iota(jnp.int32, (K, K), 0)
            ci = jax.lax.broadcasted_iota(jnp.int32, (K, K), 1)
            dij = ri - ci
            same = dij == 0
            for d in range(1, N):
                same = jnp.logical_or(
                    same, jnp.logical_or(dij == d * BS, dij == -d * BS))
            pos_mask = jnp.logical_and(same, dij != 0)   # negatives = !same

            # generalized NT-Xent with per-row max shift (stable for small T):
            #   log(exp(s)+sneg) - s == log1p(sneg / exp(s - m)), reusing es.
            m_row = jnp.max(simmat, axis=-1, keepdims=True)
            es = jnp.exp(simmat - m_row)
            sneg = jnp.sum(jnp.where(same, 0.0, es), axis=-1, keepdims=True)  # [K,1]
            pos_terms = jnp.where(pos_mask, jnp.log1p(sneg / es), 0.0)
            sm_scr[1] = jnp.sum(pos_terms) * (1.0 / Kpos)    # loss_h
            sm_scr[0] = jnp.float32(0.0)                     # init MSE accumulator

        # ---------------- phase 1: decoder tile + MSE accumulation ----------------
        @pl.when(p == 1)
        def _():
            dec = jnp.dot(hb_scr[...], wd_ref[...],
                          preferred_element_type=jnp.float32) + bd_ref[...]  # [K,TF]
            xt = x_ref[...]                                  # f32 pic tile [K,TF]
            # pic_set[n] pairs with dec[(n+1)%N]  <=>  dec rows of transform t pair
            # with pic rows of transform (t-1)%N; static BS-row slices (sublane
            # aligned, BS multiple of 8) make this explicit and sign-safe for any N.
            msum = sm_scr[0]
            for t in range(N):
                src = ((t - 1) % N) * BS
                diff = xt[src:src + BS, :] - dec[t * BS:(t + 1) * BS, :]
                msum = msum + jnp.sum(diff * diff)
            sm_scr[0] = msum

        # ---------------- final step: combine scalar losses -----------------------
        @pl.when(jnp.logical_and(p == 1, j == last_j))
        def _():
            out_ref[0, 0] = sm_scr[0] * (1.0 / (K * F)) + h_weight * sm_scr[1]

    grid_spec = pltpu.PrefetchScalarGridSpec(
        num_scalar_prefetch=0,
        grid=(2, nF),
        in_specs=[
            # x: needed in both passes (encoder contraction / MSE target)
            pl.BlockSpec((K, TF), lambda p, j: (0, j)),
            # we: stream tiles in phase 0; hold the last tile (no refetch) in phase 1
            pl.BlockSpec((TF, D), lambda p, j: (j * (1 - p) + (nF - 1) * p, 0)),
            pl.BlockSpec((1, D), lambda p, j: (0, 0)),       # be (resident)
            pl.BlockSpec((D, P), lambda p, j: (0, 0)),       # wp (tiny, resident)
            pl.BlockSpec((1, P), lambda p, j: (0, 0)),       # bp (resident)
            # wd / bd: held at tile 0 in phase 0, streamed in phase 1
            pl.BlockSpec((D, TF), lambda p, j: (0, j * p)),
            pl.BlockSpec((1, TF), lambda p, j: (0, j * p)),
        ],
        out_specs=pl.BlockSpec((1, 1), lambda p, j: (0, 0),
                               memory_space=pltpu.MemorySpace.SMEM),
        scratch_shapes=[
            pltpu.VMEM((K, D), jnp.float32),    # h accumulator (f32)
            pltpu.VMEM((K, D), jnp.bfloat16),   # h cast for phase-1 matmuls
            pltpu.SMEM((2,), jnp.float32),      # [0] = sum sq err, [1] = loss_h
        ],
    )

    cost = pl.CostEstimate(
        flops=2 * K * F * D + 2 * K * D * P + 2 * K * P * K + 2 * K * D * F,
        transcendentals=3 * K * K + K,
        bytes_accessed=(2 * (F * D + D * P + D * F)      # bf16 weights
                        + 4 * (D + P + F)                # f32 biases
                        + 2 * 4 * K * F                  # x read in both passes (f32)
                        + 4))

    loss_call = pl.pallas_call(
        kernel,
        grid_spec=grid_spec,
        out_shape=jax.ShapeDtypeStruct((1, 1), jnp.float32),
        compiler_params=pltpu.CompilerParams(
            dimension_semantics=("arbitrary", "arbitrary"),
            vmem_limit_bytes=48 * 1024 * 1024),
        cost_estimate=cost,
    )
    # TODO(synk): v7x has 2 TensorCores — split the decoder F tiles into two parallel
    # halves (per-core partial MSE scalars combined at the end, projector/NT-Xent on
    # core 0 only) or drive both cores via pl.core_map; also consider
    # pipeline_mode=pl.Buffered(3) on the we/wd tile specs for bandwidth-starved v5e.
    # TODO(synk): if multiple loss instances / microbatches run per step, stack them
    # into one call (larger K) so the weight stream is amortized over more rows.

    def prepare_params(we, be, wp, bp, wd, bd):
        # bf16 weight storage (f32 accumulation on the MXU inside the kernel);
        # biases stay f32.  Projector / decoder weights intentionally un-fused.
        return (we.astype(jnp.bfloat16), be.astype(jnp.float32).reshape(1, D),
                wp.astype(jnp.bfloat16), bp.astype(jnp.float32).reshape(1, P),
                wd.astype(jnp.bfloat16), bd.astype(jnp.float32).reshape(1, F))

    def forward(pic_set, prepared_params):
        # pic_set: stacked (N, BS, C, H, W) array (preferred) or list of N [BS,C,H,W]
        if isinstance(pic_set, (list, tuple)):
            pics = jnp.stack(pic_set, axis=0)
        else:
            pics = pic_set
        x = pics.reshape(K, F)          # contiguous collapse; stays f32 (no wrapper cast)
        we, be, wp, bp, wd, bd = prepared_params
        out = loss_call(x, we, be, wp, bp, wd, bd)
        return out[0, 0]

    mneg = jnp.asarray(get_mask_neg(N, BS), jnp.float32)
    mpos = jnp.asarray(get_mask_pos(get_mask_neg(N, BS)), jnp.float32)

    def reference(pic_set, raw_params):
        # plain-JAX reference using the ORIGINAL formulation (torch-style precomputed
        # masks, log(e+sneg)-s without max shift, jnp.roll pairing), with the same
        # bf16 operand quantization as the kernel so the comparison is tight.
        we, be, wp, bp, wd, bd = raw_params
        pics = jnp.stack(pic_set, 0) if isinstance(pic_set, (list, tuple)) else pic_set
        x = pics.reshape(K, F).astype(jnp.float32)
        xb = x.astype(jnp.bfloat16).astype(jnp.float32)
        we_q = we.astype(jnp.bfloat16).astype(jnp.float32)
        wp_q = wp.astype(jnp.bfloat16).astype(jnp.float32)
        wd_q = wd.astype(jnp.bfloat16).astype(jnp.float32)
        h = xb @ we_q + be.reshape(1, D)
        hb = h.astype(jnp.bfloat16).astype(jnp.float32)
        z = hb @ wp_q + bp.reshape(1, P)
        dec = hb @ wd_q + bd.reshape(1, F)
        zn = z * jax.lax.rsqrt(
            jnp.maximum(jnp.sum(z * z, axis=-1, keepdims=True), 1e-16))
        simmat = jnp.dot(zn, zn.T, precision=jax.lax.Precision.HIGHEST) / temperature
        e = jnp.exp(simmat)
        sneg = jnp.sum(e * mneg, axis=-1, keepdims=True)
        loss_h = jnp.sum(mpos * (jnp.log(e + sneg) - simmat)) / Kpos
        xp = jnp.roll(x.reshape(N, BS, F), shift=1, axis=0).reshape(K, F)
        loss_img = jnp.mean((xp - dec) ** 2)
        return loss_img + h_weight * loss_h

    return forward, prepare_params, reference


# ---------------------------------------------------------------------------
if __name__ == "__main__":
    C, HH, WW = 4, 16, 16        # image = NCHW
    FDIM = C * HH * WW           # 1024
    D = 128                      # encoder width
    P = 128                      # projector width
    TEMPERATURE = 0.5            # hyperparams.temperature
    H_WEIGHT = 1.0               # hyperparams.h   (hyperparams.x * 0 drops out)

    def run_case(num_transforms, batch):
        key = jax.random.PRNGKey(0)
        k_imgs, k_we, k_be, k_wp, k_bp, k_wd, k_bd = jax.random.split(key, 7)

        # deterministic synthetic parameters (f32 master copies)
        we = jax.random.normal(k_we, (FDIM, D), jnp.float32) / np.sqrt(FDIM)
        be = jax.random.normal(k_be, (1, D), jnp.float32) * 0.01
        wp = jax.random.normal(k_wp, (D, P), jnp.float32) / np.sqrt(D)
        bp = jax.random.normal(k_bp, (1, P), jnp.float32) * 0.01
        wd = jax.random.normal(k_wd, (D, FDIM), jnp.float32) / np.sqrt(D)
        bd = jax.random.normal(k_bd, (1, FDIM), jnp.float32) * 0.01
        raw_params = (we, be, wp, bp, wd, bd)

        # stacked pic set (N, BS, C, H, W) — no list concat / extra copies in wrapper
        pic_set = jax.random.normal(
            k_imgs, (num_transforms, batch, C, HH, WW), jnp.float32)

        forward, prepare_params, reference = build_denoising_loss(
            num_transforms, batch, FDIM, D, P, TEMPERATURE, H_WEIGHT)
        prepped = prepare_params(*raw_params)

        loss = jax.block_until_ready(jax.jit(forward)(pic_set, prepped))
        ref = jax.block_until_ready(reference(pic_set, raw_params))
        if not np.allclose(np.asarray(loss), np.asarray(ref), rtol=2e-2, atol=2e-2):
            raise AssertionError(
                f"mismatch (N={num_transforms}): kernel={loss} ref={ref}")

    run_case(2, 8)   # original configuration
    run_case(3, 8)   # validates the (n -> (n+1)%N) pairing beyond the degenerate N=2
    print("KERNEL_OK")
</pallas_src>

<mosaic_0001>
module attributes {stable_mosaic.version = 11 : i64} {
  func.func @kernel(%arg0: i32, %arg1: i32, %arg2: memref<16x512xf32, #tpu.memory_space<vmem>>, %arg3: memref<512x128xbf16, #tpu.memory_space<vmem>>, %arg4: memref<1x128xf32, #tpu.memory_space<vmem>>, %arg5: memref<128x128xbf16, #tpu.memory_space<vmem>>, %arg6: memref<1x128xf32, #tpu.memory_space<vmem>>, %arg7: memref<128x512xbf16, #tpu.memory_space<vmem>>, %arg8: memref<1x512xf32, #tpu.memory_space<vmem>>, %arg9: memref<1x1xf32, #tpu.memory_space<smem>>, %arg10: memref<16x128xf32, #tpu.memory_space<vmem>>, %arg11: memref<16x128xbf16, #tpu.memory_space<vmem>>, %arg12: memref<2xf32, #tpu.memory_space<smem>>) attributes {dimension_semantics = [#tpu.dimension_semantics<arbitrary>, #tpu.dimension_semantics<arbitrary>], iteration_bounds = array<i64: 2, 2>, scalar_prefetch = 0 : i64, scratch_operands = 3 : i64, tpu.core_type = #tpu.core_type<tc>, window_params = [{transform_indices = @transform_0, window_bounds = array<i64: 16, 512>}, {transform_indices = @transform_1, window_bounds = array<i64: 512, 128>}, {pipeline_mode = #tpu.pipeline_mode<synchronous>, transform_indices = @transform_2, window_bounds = array<i64: 1, 128>}, {pipeline_mode = #tpu.pipeline_mode<synchronous>, transform_indices = @transform_3, window_bounds = array<i64: 128, 128>}, {pipeline_mode = #tpu.pipeline_mode<synchronous>, transform_indices = @transform_4, window_bounds = array<i64: 1, 128>}, {transform_indices = @transform_5, window_bounds = array<i64: 128, 512>}, {transform_indices = @transform_6, window_bounds = array<i64: 1, 512>}, {transform_indices = @transform_7, window_bounds = array<i64: 1, 1>}]} {
    %c0_i32 = arith.constant 0 : i32
    %0 = arith.cmpi eq, %arg0, %c0_i32 : i32
    %c0_i32_0 = arith.constant 0 : i32
    %1 = arith.cmpi eq, %arg1, %c0_i32_0 : i32
    %2 = arith.andi %0, %1 : i1
    %3 = arith.extui %2 : i1 to i32
    %c0_i32_1 = arith.constant 0 : i32
    %4 = arith.cmpi ne, %3, %c0_i32_1 : i32
    scf.if %4 {
      %cst = arith.constant 0.000000e+00 : f32
      %21 = vector.broadcast %cst : f32 to vector<16x128xf32>
      %c0 = arith.constant 0 : index
      %c0_11 = arith.constant 0 : index
      %22 = vector.load %arg10[%c0, %c0_11] : memref<16x128xf32, #tpu.memory_space<vmem>>, vector<16x128xf32>
      tpu.vector_store %arg10[%c0, %c0_11], %21 {strides = array<i32>} : memref<16x128xf32, #tpu.memory_space<vmem>>, vector<16x128xf32>,
    } else {
    }
    %c0_i32_2 = arith.constant 0 : i32
    %5 = arith.cmpi eq, %arg0, %c0_i32_2 : i32
    %6 = arith.extui %5 : i1 to i32
    %c0_i32_3 = arith.constant 0 : i32
    %7 = arith.cmpi ne, %6, %c0_i32_3 : i32
    scf.if %7 {
      %c0 = arith.constant 0 : index
      %c0_11 = arith.constant 0 : index
      %21 = vector.load %arg2[%c0, %c0_11] : memref<16x512xf32, #tpu.memory_space<vmem>>, vector<16x512xf32>
      %22 = arith.truncf %21 : vector<16x512xf32> to vector<16x512xbf16>
      %c0_12 = arith.constant 0 : index
      %c0_13 = arith.constant 0 : index
      %23 = vector.load %arg10[%c0_12, %c0_13] : memref<16x128xf32, #tpu.memory_space<vmem>>, vector<16x128xf32>
      %c0_14 = arith.constant 0 : index
      %c0_15 = arith.constant 0 : index
      %24 = vector.load %arg3[%c0_14, %c0_15] : memref<512x128xbf16, #tpu.memory_space<vmem>>, vector<512x128xbf16>
      %cst = arith.constant dense<0.000000e+00> : vector<16x128xf32>
      %25 = tpu.matmul %22, %24, %cst {dimension_numbers = #tpu.dot_dimension_numbers<[1], [0], [0], [1], [0, 0, 1, 1], [], []>} : vector<16x512xbf16>, vector<512x128xbf16>, vector<16x128xf32> -> vector<16x128xf32>
      %26 = arith.addf %23, %25 : vector<16x128xf32>
      %c0_16 = arith.constant 0 : index
      %c0_17 = arith.constant 0 : index
      %27 = vector.load %arg10[%c0_16, %c0_17] : memref<16x128xf32, #tpu.memory_space<vmem>>, vector<16x128xf32>
      tpu.vector_store %arg10[%c0_16, %c0_17], %26 {strides = array<i32>} : memref<16x128xf32, #tpu.memory_space<vmem>>, vector<16x128xf32>,
    } else {
    }
    %c1_i32 = arith.constant 1 : i32
    %8 = arith.cmpi eq, %arg0, %c1_i32 : i32
    %c0_i32_4 = arith.constant 0 : i32
    %9 = arith.cmpi eq, %arg1, %c0_i32_4 : i32
    %10 = arith.andi %8, %9 : i1
    %11 = arith.extui %10 : i1 to i32
    %c0_i32_5 = arith.constant 0 : i32
    %12 = arith.cmpi ne, %11, %c0_i32_5 : i32
    scf.if %12 {
      %c0 = arith.constant 0 : index
      %c0_11 = arith.constant 0 : index
      %21 = vector.load %arg10[%c0, %c0_11] : memref<16x128xf32, #tpu.memory_space<vmem>>, vector<16x128xf32>
      %c0_12 = arith.constant 0 : index
      %c0_13 = arith.constant 0 : index
      %22 = vector.load %arg4[%c0_12, %c0_13] : memref<1x128xf32, #tpu.memory_space<vmem>>, vector<1x128xf32>
      %23 = vector.broadcast %22 : vector<1x128xf32> to vector<16x128xf32>
      %24 = arith.addf %21, %23 : vector<16x128xf32>
      %25 = arith.truncf %24 : vector<16x128xf32> to vector<16x128xbf16>
      %c0_14 = arith.constant 0 : index
      %c0_15 = arith.constant 0 : index
      %26 = vector.load %arg11[%c0_14, %c0_15] : memref<16x128xbf16, #tpu.memory_space<vmem>>, vector<16x128xbf16>
      tpu.vector_store %arg11[%c0_14, %c0_15], %25 {strides = array<i32>} : memref<16x128xbf16, #tpu.memory_space<vmem>>, vector<16x128xbf16>,
      %c0_16 = arith.constant 0 : index
      %c0_17 = arith.constant 0 : index
      %27 = vector.load %arg11[%c0_16, %c0_17] : memref<16x128xbf16, #tpu.memory_space<vmem>>, vector<16x128xbf16>
      %c0_18 = arith.constant 0 : index
      %c0_19 = arith.constant 0 : index
      %28 = vector.load %arg5[%c0_18, %c0_19] : memref<128x128xbf16, #tpu.memory_space<vmem>>, vector<128x128xbf16>
      %cst = arith.constant dense<0.000000e+00> : vector<16x128xf32>
      %29 = tpu.matmul %27, %28, %cst {dimension_numbers = #tpu.dot_dimension_numbers<[1], [0], [0], [1], [0, 0, 1, 1], [], []>} : vector<16x128xbf16>, vector<128x128xbf16>, vector<16x128xf32> -> vector<16x128xf32>
      %c0_20 = arith.constant 0 : index
      %c0_21 = arith.constant 0 : index
      %30 = vector.load %arg6[%c0_20, %c0_21] : memref<1x128xf32, #tpu.memory_space<vmem>>, vector<1x128xf32>
      %31 = vector.broadcast %30 : vector<1x128xf32> to vector<16x128xf32>
      %32 = arith.addf %29, %31 : vector<16x128xf32>
      %33 = arith.mulf %32, %32 : vector<16x128xf32>
      %cst_22 = arith.constant dense<0.000000e+00> : vector<16xf32>
      %34 = vector.multi_reduction <add>, %33, %cst_22 [1] : vector<16x128xf32> to vector<16xf32>
      %35 = vector.shape_cast %34 : vector<16xf32> to vector<16x1xf32>
      %cst_23 = arith.constant 1.000000e-16 : f32
      %36 = vector.broadcast %cst_23 : f32 to vector<16x1xf32>
      %37 = arith.maximumf %35, %36 : vector<16x1xf32>
      %38 = math.rsqrt %37 : vector<16x1xf32>
      %39 = vector.broadcast %38 : vector<16x1xf32> to vector<16x128xf32>
      %40 = arith.mulf %32, %39 : vector<16x128xf32>
      %cst_24 = arith.constant dense<0.000000e+00> : vector<16x16xf32>
      %41 = tpu.matmul %40, %40, %cst_24 {dimension_numbers = #tpu.dot_dimension_numbers<[1], [1], [0], [0], [0, 0, 1, 0], [], []>} : vector<16x128xf32>, vector<16x128xf32>, vector<16x16xf32> -> vector<16x16xf32>
      %cst_25 = arith.constant 2.000000e+00 : f32
      %42 = vector.broadcast %cst_25 : f32 to vector<16x16xf32>
      %43 = arith.mulf %41, %42 : vector<16x16xf32>
      %44 = tpu.iota {dimensions = array<i32: 0>} : vector<16x16xi32>
      %45 = tpu.iota {dimensions = array<i32: 1>} : vector<16x16xi32>
      %46 = arith.subi %44, %45 : vector<16x16xi32>
      %c0_i32_26 = arith.constant 0 : i32
      %47 = vector.broadcast %c0_i32_26 : i32 to vector<16x16xi32>
      %48 = arith.cmpi eq, %46, %47 : vector<16x16xi32>
      %c8_i32 = arith.constant 8 : i32
      %49 = vector.broadcast %c8_i32 : i32 to vector<16x16xi32>
      %50 = arith.cmpi eq, %46, %49 : vector<16x16xi32>
      %c-8_i32 = arith.constant -8 : i32
      %51 = vector.broadcast %c-8_i32 : i32 to vector<16x16xi32>
      %52 = arith.cmpi eq, %46, %51 : vector<16x16xi32>
      %53 = arith.ori %50, %52 : vector<16x16xi1>
      %54 = arith.ori %48, %53 : vector<16x16xi1>
      %c0_i32_27 = arith.constant 0 : i32
      %55 = vector.broadcast %c0_i32_27 : i32 to vector<16x16xi32>
      %56 = arith.cmpi ne, %46, %55 : vector<16x16xi32>
      %57 = arith.andi %54, %56 : vector<16x16xi1>
      %cst_28 = arith.constant dense<0xFF800000> : vector<16xf32>
      %58 = vector.multi_reduction <maximumf>, %43, %cst_28 [1] : vector<16x16xf32> to vector<16xf32>
      %59 = vector.shape_cast %58 : vector<16xf32> to vector<16x1xf32>
      %60 = vector.broadcast %59 : vector<16x1xf32> to vector<16x16xf32>
      %61 = arith.subf %43, %60 : vector<16x16xf32>
      %62 = math.exp %61 : vector<16x16xf32>
      %cst_29 = arith.constant 0.000000e+00 : f32
      %63 = vector.broadcast %cst_29 : f32 to vector<16x16xf32>
      %64 = arith.select %54, %63, %62 : vector<16x16xi1>, vector<16x16xf32>
      %cst_30 = arith.constant dense<0.000000e+00> : vector<16xf32>
      %65 = vector.multi_reduction <add>, %64, %cst_30 [1] : vector<16x16xf32> to vector<16xf32>
      %66 = vector.shape_cast %65 : vector<16xf32> to vector<16x1xf32>
      %67 = vector.broadcast %66 : vector<16x1xf32> to vector<16x16xf32>
      %68 = arith.divf %67, %62 : vector<16x16xf32>
      %69 = math.log1p %68 : vector<16x16xf32>
      %cst_31 = arith.constant 0.000000e+00 : f32
      %70 = vector.broadcast %cst_31 : f32 to vector<16x16xf32>
      %71 = arith.select %57, %69, %70 : vector<16x16xi1>, vector<16x16xf32>
      %72 = vector.shape_cast %71 : vector<16x16xf32> to vector<1x16x16xf32>
      %cst_32 = arith.constant dense<0.000000e+00> : vector<1xf32>
      %73 = vector.multi_reduction <add>, %72, %cst_32 [1, 2] : vector<1x16x16xf32> to vector<1xf32>
      %74 = vector.shape_cast %73 : vector<1xf32> to vector<1x1x1xf32>
      %75 = vector.extract %74[0, 0, 0] : f32 from vector<1x1x1xf32>
      %cst_33 = arith.constant 6.250000e-02 : f32
      %76 = arith.mulf %75, %cst_33 : f32
      %c1 = arith.constant 1 : index
      %77 = memref.load %arg12[%c1] : memref<2xf32, #tpu.memory_space<smem>>
      memref.store %76, %arg12[%c1] : memref<2xf32, #tpu.memory_space<smem>>
      %cst_34 = arith.constant 0.000000e+00 : f32
      %c0_35 = arith.constant 0 : index
      %78 = memref.load %arg12[%c0_35] : memref<2xf32, #tpu.memory_space<smem>>
      memref.store %cst_34, %arg12[%c0_35] : memref<2xf32, #tpu.memory_space<smem>>
    } else {
    }
    %c1_i32_6 = arith.constant 1 : i32
    %13 = arith.cmpi eq, %arg0, %c1_i32_6 : i32
    %14 = arith.extui %13 : i1 to i32
    %c0_i32_7 = arith.constant 0 : i32
    %15 = arith.cmpi ne, %14, %c0_i32_7 : i32
    scf.if %15 {
      %c0 = arith.constant 0 : index
      %c0_11 = arith.constant 0 : index
      %21 = vector.load %arg11[%c0, %c0_11] : memref<16x128xbf16, #tpu.memory_space<vmem>>, vector<16x128xbf16>
      %c0_12 = arith.constant 0 : index
      %c0_13 = arith.constant 0 : index
      %22 = vector.load %arg7[%c0_12, %c0_13] : memref<128x512xbf16, #tpu.memory_space<vmem>>, vector<128x512xbf16>
      %cst = arith.constant dense<0.000000e+00> : vector<16x512xf32>
      %23 = tpu.matmul %21, %22, %cst {dimension_numbers = #tpu.dot_dimension_numbers<[1], [0], [0], [1], [0, 0, 1, 1], [], []>} : vector<16x128xbf16>, vector<128x512xbf16>, vector<16x512xf32> -> vector<16x512xf32>
      %c0_14 = arith.constant 0 : index
      %c0_15 = arith.constant 0 : index
      %24 = vector.load %arg8[%c0_14, %c0_15] : memref<1x512xf32, #tpu.memory_space<vmem>>, vector<1x512xf32>
      %25 = vector.broadcast %24 : vector<1x512xf32> to vector<16x512xf32>
      %26 = arith.addf %23, %25 : vector<16x512xf32>
      %c0_16 = arith.constant 0 : index
      %c0_17 = arith.constant 0 : index
      %27 = vector.load %arg2[%c0_16, %c0_17] : memref<16x512xf32, #tpu.memory_space<vmem>>, vector<16x512xf32>
      %c0_18 = arith.constant 0 : index
      %28 = memref.load %arg12[%c0_18] : memref<2xf32, #tpu.memory_space<smem>>
      %29 = vector.extract_strided_slice %27 {offsets = [8, 0], sizes = [8, 512], strides = [1, 1]} : vector<16x512xf32> to vector<8x512xf32>
      %30 = vector.extract_strided_slice %26 {offsets = [0, 0], sizes = [8, 512], strides = [1, 1]} : vector<16x512xf32> to vector<8x512xf32>
      %31 = arith.subf %29, %30 : vector<8x512xf32>
      %32 = arith.mulf %31, %31 : vector<8x512xf32>
      %33 = vector.shape_cast %32 : vector<8x512xf32> to vector<1x8x512xf32>
      %cst_19 = arith.constant dense<0.000000e+00> : vector<1xf32>
      %34 = vector.multi_reduction <add>, %33, %cst_19 [1, 2] : vector<1x8x512xf32> to vector<1xf32>
      %35 = vector.shape_cast %34 : vector<1xf32> to vector<1x1x1xf32>
      %36 = vector.extract %35[0, 0, 0] : f32 from vector<1x1x1xf32>
      %37 = arith.addf %28, %36 : f32
      %38 = vector.extract_strided_slice %27 {offsets = [0, 0], sizes = [8, 512], strides = [1, 1]} : vector<16x512xf32> to vector<8x512xf32>
      %39 = vector.extract_strided_slice %26 {offsets = [8, 0], sizes = [8, 512], strides = [1, 1]} : vector<16x512xf32> to vector<8x512xf32>
      %40 = arith.subf %38, %39 : vector<8x512xf32>
      %41 = arith.mulf %40, %40 : vector<8x512xf32>
      %42 = vector.shape_cast %41 : vector<8x512xf32> to vector<1x8x512xf32>
      %cst_20 = arith.constant dense<0.000000e+00> : vector<1xf32>
      %43 = vector.multi_reduction <add>, %42, %cst_20 [1, 2] : vector<1x8x512xf32> to vector<1xf32>
      %44 = vector.shape_cast %43 : vector<1xf32> to vector<1x1x1xf32>
      %45 = vector.extract %44[0, 0, 0] : f32 from vector<1x1x1xf32>
      %46 = arith.addf %37, %45 : f32
      %c0_21 = arith.constant 0 : index
      %47 = memref.load %arg12[%c0_21] : memref<2xf32, #tpu.memory_space<smem>>
      memref.store %46, %arg12[%c0_21] : memref<2xf32, #tpu.memory_space<smem>>
    } else {
    }
    %c1_i32_8 = arith.constant 1 : i32
    %16 = arith.cmpi eq, %arg0, %c1_i32_8 : i32
    %c1_i32_9 = arith.constant 1 : i32
    %17 = arith.cmpi eq, %arg1, %c1_i32_9 : i32
    %18 = arith.andi %16, %17 : i1
    %19 = arith.extui %18 : i1 to i32
    %c0_i32_10 = arith.constant 0 : i32
    %20 = arith.cmpi ne, %19, %c0_i32_10 : i32
    scf.if %20 {
      %c0 = arith.constant 0 : index
      %21 = memref.load %arg12[%c0] : memref<2xf32, #tpu.memory_space<smem>>
      %cst = arith.constant 6.10351563E-5 : f32
      %22 = arith.mulf %21, %cst : f32
      %c1 = arith.constant 1 : index
      %23 = memref.load %arg12[%c1] : memref<2xf32, #tpu.memory_space<smem>>
      %cst_11 = arith.constant 1.000000e+00 : f32
      %24 = arith.mulf %cst_11, %23 : f32
      %25 = arith.addf %22, %24 : f32
      %c0_12 = arith.constant 0 : index
      %c0_13 = arith.constant 0 : index
      %26 = memref.load %arg9[%c0_12, %c0_13] : memref<1x1xf32, #tpu.memory_space<smem>>
      memref.store %25, %arg9[%c0_12, %c0_13] : memref<1x1xf32, #tpu.memory_space<smem>>
    } else {
    }
    return
  }
  func.func @transform_0(%arg0: i32, %arg1: i32) -> (i32, i32) {
    %c0_i32 = arith.constant 0 : i32
    %c0_i32_0 = arith.constant 0 : i32
    return %c0_i32, %arg1 : i32, i32
  }
  func.func @transform_1(%arg0: i32, %arg1: i32) -> (i32, i32) {
    %c1_i32 = arith.constant 1 : i32
    %0 = arith.subi %c1_i32, %arg0 : i32
    %1 = arith.muli %arg1, %0 : i32
    %c1_i32_0 = arith.constant 1 : i32
    %2 = arith.muli %c1_i32_0, %arg0 : i32
    %3 = arith.addi %1, %2 : i32
    %c0_i32 = arith.constant 0 : i32
    %c0_i32_1 = arith.constant 0 : i32
    return %3, %c0_i32 : i32, i32
  }
  func.func @transform_2(%arg0: i32, %arg1: i32) -> (i32, i32) {
    %c0_i32 = arith.constant 0 : i32
    %c0_i32_0 = arith.constant 0 : i32
    %c0_i32_1 = arith.constant 0 : i32
    return %c0_i32, %c0_i32_0 : i32, i32
  }
  func.func @transform_3(%arg0: i32, %arg1: i32) -> (i32, i32) {
    %c0_i32 = arith.constant 0 : i32
    %c0_i32_0 = arith.constant 0 : i32
    %c0_i32_1 = arith.constant 0 : i32
    return %c0_i32, %c0_i32_0 : i32, i32
  }
  func.func @transform_4(%arg0: i32, %arg1: i32) -> (i32, i32) {
    %c0_i32 = arith.constant 0 : i32
    %c0_i32_0 = arith.constant 0 : i32
    %c0_i32_1 = arith.constant 0 : i32
    return %c0_i32, %c0_i32_0 : i32, i32
  }
  func.func @transform_5(%arg0: i32, %arg1: i32) -> (i32, i32) {
    %0 = arith.muli %arg1, %arg0 : i32
    %c0_i32 = arith.constant 0 : i32
    %c0_i32_0 = arith.constant 0 : i32
    return %c0_i32, %0 : i32, i32
  }
  func.func @transform_6(%arg0: i32, %arg1: i32) -> (i32, i32) {
    %0 = arith.muli %arg1, %arg0 : i32
    %c0_i32 = arith.constant 0 : i32
    %c0_i32_0 = arith.constant 0 : i32
    return %c0_i32, %0 : i32, i32
  }
  func.func @transform_7(%arg0: i32, %arg1: i32) -> (i32, i32) {
    %c0_i32 = arith.constant 0 : i32
    %c0_i32_0 = arith.constant 0 : i32
    %c0_i32_1 = arith.constant 0 : i32
    return %c0_i32, %c0_i32_0 : i32, i32
  }
}

</mosaic_0001>

<llo_original>
// kernel: forward.1
$region0: #{forward.1}
  #allocation0 [shape = 'u32[]', space=smem, size = 0x4, offset = 0x4, fixed_abs, tag = 'smem constant byte address 0x4 - core index']
  #allocation1 [shape = 'u32[144,128]{1,0:T(1,128)}', space=vmem, size = 0x12000, scoped, tag = 'internal scratch']
  #allocation2 [shape = 'f32[16,128]{1,0:T(8,128)}', space=vmem, size = 0x2000, scoped, tag = 'scratch operand']
  #allocation3 [shape = 'bf16[16,128]{1,0:T(8,128)(2,1)}', space=vmem, size = 0x1000, scoped, tag = 'scratch operand']
  #allocation4 [shape = 'f32[2]{0:T(128)}', space=smem, size = 0x200, scoped, tag = 'scratch operand']
  %s0 = inlined_call_operand.vmem [shape: f32[16,1024], index: 0, kind: input, shape index: {}]
  %s1 = inlined_call_operand.vmem [shape: bf16[1024,128], index: 1, kind: input, shape index: {}]
  %s2 = inlined_call_operand.vmem [shape: f32[1,128], index: 2, kind: input, shape index: {}]
  %s3 = inlined_call_operand.vmem [shape: bf16[128,128], index: 3, kind: input, shape index: {}]
  %s4 = inlined_call_operand.vmem [shape: f32[1,128], index: 4, kind: input, shape index: {}]
  %s5 = inlined_call_operand.vmem [shape: bf16[128,1024], index: 5, kind: input, shape index: {}]
  %s6 = inlined_call_operand.vmem [shape: f32[1,1024], index: 6, kind: input, shape index: {}]
  %s7 = inlined_call_operand.hbm [shape: f32[1,1], index: 7, kind: output, shape index: {}]
  %s8 = sld [smem:[#allocation0]]
  $region127: #{forward.1} parent=0
    _
  %s10 = ssub.s32 1, %s8
  %s11 = scalar_select 0, %s10, %s8
  $region1: #{forward.1} parent=0
    #allocation5 [shape = 'u8[65536]{0}', space=vmem, size = 0x10000, scoped, tag = 'input window, operand 0']
    #allocation6 [shape = 'u8[262144]{0}', space=vmem, size = 0x40000, scoped, tag = 'input window, operand 5']
    #allocation7 [shape = 'u8[512]{0}', space=smem, size = 0x200, scoped, tag = 'output window, operand 0, single buffered']
    #allocation8 [shape = 's32[2]{0}', space=sflag, size = 0x8, scoped, tag = 'scoped memory for forward.1']
    %12 = vsyncpa [#allocation8], 0
    loop: start=0, step=1, limit=6
    $region2: #{forward.1} parent=1 // loop_pre_header
      _
    $region3: #{forward.1} parent=1 // loop_header
      %s14 = sphi 0, %s18
      %p15 = scmp.ge.s32.totalorder %s14, 6
      %s21 = sphi 0, %s33
      %s22 = sphi 0, %s29
      %s23 = sphi 0, %s21
      %s24 = sphi 0, %s22
      %s25 = sphi 0, %s23
      %s26 = sphi 0, %s24
      %s36 = sphi 0, %s38
      %s39 = sphi 0, %s36
      %s40 = sphi 0, %s39
      %s56 = sphi 0, %s40
      %s68 = sphi 0, %s70
      %s71 = sphi 0, %s68
      %s72 = sphi 0, %s71
      %s88 = sphi 0, %s72
      %s92 = sphi 0, %s92
      %s94 = sphi 0, %s92
      %s95 = sphi 0, %s94
      %s109 = sphi 0, %s95
      %s113 = sphi 0, %s113
      %s115 = sphi 0, %s113
      %s116 = sphi 0, %s115
      %s130 = sphi 0, %s116
      %s134 = sphi 0, %s134
      %s136 = sphi 0, %s134
      %s137 = sphi 0, %s136
      %s151 = sphi 0, %s137
      %s159 = sphi 0, %s161
      %s162 = sphi 0, %s159
      %s163 = sphi 0, %s162
      %s179 = sphi 0, %s163
      %s187 = sphi 0, %s189
      %s190 = sphi 0, %s187
      %s191 = sphi 0, %s190
      %s207 = sphi 0, %s191
      %s211 = sphi 0, %s211
      %s213 = sphi 0, %s211
      %s214 = sphi 0, %s213
      %s228 = sphi 0, %s214
    $region4: #{forward.1} parent=1 // loop_header_branch
      %17 = sbr.rel (%p15) target = $region8
    $region5: #{forward.1} parent=1 // loop_body
      %s19 = ssub.s32 %s14, 1
      %s20 = ssub.s32 %s14, 2
      %s27 = sadd.s32 1, %s22
      %p28 = scmp.ge.s32.totalorder %s27, 2
      %s29 = scalar_select %p28, 0, %s27
      %s30 = sadd.s32 1, %s21
      %s31 = scalar_select %p28, %s30, %s21
      %p32 = scmp.ge.s32.totalorder %s31, 2
      %s33 = scalar_select %p32, 0, %s31
      %s34 = ssub.s32 %s22, %s29
      %p35 = scmp.eq.s32.totalorder %s34, 0
      %s37 = sadd.s32 %s36, 1
      %s38 = scalar_select %p35, %s36, %s37
      %p41 = pneg %p35
      %p42 = scmp.eq.s32.totalorder %s14, 3
      %p43 = por %p41, %p42
      %p44 = scmp.ne.s32.totalorder %s36, %s39
      %p45 = scmp.eq.s32.totalorder %s14, 0
      %p46 = por %p44, %p45
      %p47 = scmp.ne.s32.totalorder %s36, %s39
      %p48 = scmp.eq.s32.totalorder %s19, 3
      %p49 = por %p47, %p48
      %p50 = scmp.ne.s32.totalorder %s39, %s40
      %p51 = scmp.eq.s32.totalorder %s19, 0
      %p52 = por %p50, %p51
      %p53 = scmp.ne.s32.totalorder %s39, %s40
      %p54 = scmp.eq.s32.totalorder %s20, 3
      %p55 = por %p53, %p54
      %p57 = scmp.ne.s32.totalorder %s40, %s56
      %p58 = scmp.eq.s32.totalorder %s20, 0
      %p59 = por %p57, %p58
      %s60 = ssub.s32 1, %s21
      %s61 = smul.u32 %s22, %s60
      %s62 = sadd.s32 %s61, %s21
      %s63 = ssub.s32 1, %s33
      %s64 = smul.u32 %s29, %s63
      %s65 = sadd.s32 %s64, %s33
      %s66 = ssub.s32 %s62, %s65
      %p67 = scmp.eq.s32.totalorder %s66, 0
      %s69 = sadd.s32 %s68, 1
      %s70 = scalar_select %p67, %s68, %s69
      %p73 = pneg %p67
      %p74 = scmp.eq.s32.totalorder %s14, 3
      %p75 = por %p73, %p74
      %p76 = scmp.ne.s32.totalorder %s68, %s71
      %p77 = scmp.eq.s32.totalorder %s14, 0
      %p78 = por %p76, %p77
      %p79 = scmp.ne.s32.totalorder %s68, %s71
      %p80 = scmp.eq.s32.totalorder %s19, 3
      %p81 = por %p79, %p80
      %p82 = scmp.ne.s32.totalorder %s71, %s72
      %p83 = scmp.eq.s32.totalorder %s19, 0
      %p84 = por %p82, %p83
      %p85 = scmp.ne.s32.totalorder %s71, %s72
      %p86 = scmp.eq.s32.totalorder %s20, 3
      %p87 = por %p85, %p86
      %p89 = scmp.ne.s32.totalorder %s72, %s88
      %p90 = scmp.eq.s32.totalorder %s20, 0
      %p91 = por %p89, %p90
      %s93 = sadd.s32 %s92, 1
      %p96 = scmp.eq.s32.totalorder %s14, 3
      %p97 = scmp.ne.s32.totalorder %s92, %s94
      %p98 = scmp.eq.s32.totalorder %s14, 0
      %p99 = por %p97, %p98
      %p100 = scmp.ne.s32.totalorder %s92, %s94
      %p101 = scmp.eq.s32.totalorder %s19, 3
      %p102 = por %p100, %p101
      %p103 = scmp.ne.s32.totalorder %s94, %s95
      %p104 = scmp.eq.s32.totalorder %s19, 0
      %p105 = por %p103, %p104
      %p106 = scmp.ne.s32.totalorder %s94, %s95
      %p107 = scmp.eq.s32.totalorder %s20, 3
      %p108 = por %p106, %p107
      %p110 = scmp.ne.s32.totalorder %s95, %s109
      %p111 = scmp.eq.s32.totalorder %s20, 0
      %p112 = por %p110, %p111
      %s114 = sadd.s32 %s113, 1
      %p117 = scmp.eq.s32.totalorder %s14, 3
      %p118 = scmp.ne.s32.totalorder %s113, %s115
      %p119 = scmp.eq.s32.totalorder %s14, 0
      %p120 = por %p118, %p119
      %p121 = scmp.ne.s32.totalorder %s113, %s115
      %p122 = scmp.eq.s32.totalorder %s19, 3
      %p123 = por %p121, %p122
      %p124 = scmp.ne.s32.totalorder %s115, %s116
      %p125 = scmp.eq.s32.totalorder %s19, 0
      %p126 = por %p124, %p125
      %p127 = scmp.ne.s32.totalorder %s115, %s116
      %p128 = scmp.eq.s32.totalorder %s20, 3
      %p129 = por %p127, %p128
      %p131 = scmp.ne.s32.totalorder %s116, %s130
      %p132 = scmp.eq.s32.totalorder %s20, 0
      %p133 = por %p131, %p132
      %s135 = sadd.s32 %s134, 1
      %p138 = scmp.eq.s32.totalorder %s14, 3
      %p139 = scmp.ne.s32.totalorder %s134, %s136
      %p140 = scmp.eq.s32.totalorder %s14, 0
      %p141 = por %p139, %p140
      %p142 = scmp.ne.s32.totalorder %s134, %s136
      %p143 = scmp.eq.s32.totalorder %s19, 3
      %p144 = por %p142, %p143
      %p145 = scmp.ne.s32.totalorder %s136, %s137
      %p146 = scmp.eq.s32.totalorder %s19, 0
      %p147 = por %p145, %p146
      %p148 = scmp.ne.s32.totalorder %s136, %s137
      %p149 = scmp.eq.s32.totalorder %s20, 3
      %p150 = por %p148, %p149
      %p152 = scmp.ne.s32.totalorder %s137, %s151
      %p153 = scmp.eq.s32.totalorder %s20, 0
      %p154 = por %p152, %p153
      %s155 = smul.u32 %s22, %s21
      %s156 = smul.u32 %s29, %s33
      %s157 = ssub.s32 %s155, %s156
      %p158 = scmp.eq.s32.totalorder %s157, 0
      %s160 = sadd.s32 %s159, 1
      %s161 = scalar_select %p158, %s159, %s160
      %p164 = pneg %p158
      %p165 = scmp.eq.s32.totalorder %s14, 3
      %p166 = por %p164, %p165
      %p167 = scmp.ne.s32.totalorder %s159, %s162
      %p168 = scmp.eq.s32.totalorder %s14, 0
      %p169 = por %p167, %p168
      %p170 = scmp.ne.s32.totalorder %s159, %s162
      %p171 = scmp.eq.s32.totalorder %s19, 3
      %p172 = por %p170, %p171
      %p173 = scmp.ne.s32.totalorder %s162, %s163
      %p174 = scmp.eq.s32.totalorder %s19, 0
      %p175 = por %p173, %p174
      %p176 = scmp.ne.s32.totalorder %s162, %s163
      %p177 = scmp.eq.s32.totalorder %s20, 3
      %p178 = por %p176, %p177
      %p180 = scmp.ne.s32.totalorder %s163, %s179
      %p181 = scmp.eq.s32.totalorder %s20, 0
      %p182 = por %p180, %p181
      %s183 = smul.u32 %s22, %s21
      %s184 = smul.u32 %s29, %s33
      %s185 = ssub.s32 %s183, %s184
      %p186 = scmp.eq.s32.totalorder %s185, 0
      %s188 = sadd.s32 %s187, 1
      %s189 = scalar_select %p186, %s187, %s188
      %p192 = pneg %p186
      %p193 = scmp.eq.s32.totalorder %s14, 3
      %p194 = por %p192, %p193
      %p195 = scmp.ne.s32.totalorder %s187, %s190
      %p196 = scmp.eq.s32.totalorder %s14, 0
      %p197 = por %p195, %p196
      %p198 = scmp.ne.s32.totalorder %s187, %s190
      %p199 = scmp.eq.s32.totalorder %s19, 3
      %p200 = por %p198, %p199
      %p201 = scmp.ne.s32.totalorder %s190, %s191
      %p202 = scmp.eq.s32.totalorder %s19, 0
      %p203 = por %p201, %p202
      %p204 = scmp.ne.s32.totalorder %s190, %s191
      %p205 = scmp.eq.s32.totalorder %s20, 3
      %p206 = por %p204, %p205
      %p208 = scmp.ne.s32.totalorder %s191, %s207
      %p209 = scmp.eq.s32.totalorder %s20, 0
      %p210 = por %p208, %p209
      %s212 = sadd.s32 %s211, 1
      %p215 = scmp.eq.s32.totalorder %s14, 3
      %p216 = scmp.ne.s32.totalorder %s211, %s213
      %p217 = scmp.eq.s32.totalorder %s14, 0
      %p218 = por %p216, %p217
      %p219 = scmp.ne.s32.totalorder %s211, %s213
      %p220 = scmp.eq.s32.totalorder %s19, 3
      %p221 = por %p219, %p220
      %p222 = scmp.ne.s32.totalorder %s213, %s214
      %p223 = scmp.eq.s32.totalorder %s19, 0
      %p224 = por %p222, %p223
      %p225 = scmp.ne.s32.totalorder %s213, %s214
      %p226 = scmp.eq.s32.totalorder %s20, 3
      %p227 = por %p225, %p226
      %p229 = scmp.ne.s32.totalorder %s214, %s228
      %p230 = scmp.eq.s32.totalorder %s20, 0
      %p231 = por %p229, %p230
      %p232 = scmp.le.s32.totalorder 1, %s14
      %p233 = scmp.lt.s32.totalorder %s14, 5
      %p234 = pnand %p232, %p233
      %p235 = pneg %p234
      // Predicated region
      $region9: #{forward.1} parent=5 // pred_check
        _
      $region10: #{forward.1} parent=5 // pred_check_branch
        %237 = sbr.rel (%p234) target = $region12
      $region11: #{forward.1} parent=5 // pred_region
        %s238 = ssub.s32 %s14, 1
        // Predicated region
        $region13: #{forward.1} parent=11 // pred_check
          %p239 = pneg %p105
        $region14: #{forward.1} parent=11 // pred_check_branch
          %241 = sbr.rel (%p239) target = $region16
        $region15: #{forward.1} parent=11 // pred_region
          _
        $region16: #{forward.1} parent=11 // pred_fallthru
          _
        // Predicated region
        $region17: #{forward.1} parent=11 // pred_check
          %p242 = pneg %p126
        $region18: #{forward.1} parent=11 // pred_check_branch
          %244 = sbr.rel (%p242) target = $region20
        $region19: #{forward.1} parent=11 // pred_region
          _
        $region20: #{forward.1} parent=11 // pred_fallthru
          _
        // Predicated region
        $region21: #{forward.1} parent=11 // pred_check
          %p245 = pneg %p147
        $region22: #{forward.1} parent=11 // pred_check_branch
          %247 = sbr.rel (%p245) target = $region24
        $region23: #{forward.1} parent=11 // pred_region
          _
        $region24: #{forward.1} parent=11 // pred_fallthru
          _
      $region12: #{forward.1} parent=5 // pred_fallthru
        _
      %p248 = scmp.lt.s32.totalorder %s14, 4
      // Predicated region
      $region25: #{forward.1} parent=5 // pred_check
        %p249 = pneg %p248
      $region26: #{forward.1} parent=5 // pred_check_branch
        %251 = sbr.rel (%p249) target = $region28
      $region27: #{forward.1} parent=5 // pred_region
        // Predicated region
        $region29: #{forward.1} parent=27 // pred_check
          %p252 = pneg %p46
        $region30: #{forward.1} parent=27 // pred_check_branch
          %254 = sbr.rel (%p252) target = $region32
        $region31: #{forward.1} parent=27 // pred_region
          %s255 = sand.u32 %s36, 1
          %s256 = sand.u32 %s36, 1
          %s257 = smul.addr %s256, 64
          %s258 = scalar_lea.vmem [#allocation5], %s257
          %s259 = smul.u32 4, %s22
          %s260 = smul.addr %s259, 8
          %s261 = scalar_lea.vmem %s0, %s260
          // Predicated region
          $region33: #{forward.1} parent=31 // pred_check
            _
          $region34: #{forward.1} parent=31 // pred_check_branch
            %263 = sbr.rel (0) target = $region36
          $region35: #{forward.1} parent=31 // pred_region
            // Predicated region
            $region37: #{forward.1} parent=35 // pred_check
              _
            $region38: #{forward.1} parent=35 // pred_check_branch
              %265 = sbr.rel (0) target = $region40
            $region39: #{forward.1} parent=35 // pred_region
              loop: start=0, step=1, limit=1
              $region41: #{forward.1} parent=39 // loop_pre_header
                _
              $region42: #{forward.1} parent=39 // loop_header
                %s267 = sphi 0, %s271
                %p268 = scmp.ge.s32.totalorder %s267, 1
                %s272 = sphi %s261, %s261
                %s273 = sphi %s258, %s258
              $region43: #{forward.1} parent=39 // loop_header_branch
                %270 = sbr.rel (%p268) target = $region47
              $region44: #{forward.1} parent=39 // loop_body
                %v274 = vld [vmem:[%s272] sm:$0xff]
                %275 = vst [vmem:[%s273] sm:$0xff] %v274
                %v276 = vld [vmem:[%s272 + $0x8] sm:$0xff]
                %277 = vst [vmem:[%s273 + $0x8] sm:$0xff] %v276
                %v278 = vld [vmem:[%s272 + $0x10] sm:$0xff]
                %279 = vst [vmem:[%s273 + $0x10] sm:$0xff] %v278
                %v280 = vld [vmem:[%s272 + $0x18] sm:$0xff]
                %281 = vst [vmem:[%s273 + $0x18] sm:$0xff] %v280
                %v282 = vld [vmem:[%s272 + $0x40] sm:$0xff]
                %283 = vst [vmem:[%s273 + $0x20] sm:$0xff] %v282
                %v284 = vld [vmem:[%s272 + $0x48] sm:$0xff]
                %285 = vst [vmem:[%s273 + $0x28] sm:$0xff] %v284
                %v286 = vld [vmem:[%s272 + $0x50] sm:$0xff]
                %287 = vst [vmem:[%s273 + $0x30] sm:$0xff] %v286
                %v288 = vld [vmem:[%s272 + $0x58] sm:$0xff]
                %289 = vst [vmem:[%s273 + $0x38] sm:$0xff] %v288
              $region45: #{forward.1} parent=39 // loop_footer
                %s271 = sadd.s32 1, %s267
              $region46: #{forward.1} parent=39 // loop_footer_branch
                %266 = sbr.rel target = $region42
              $region47: #{forward.1} parent=39 // loop_exit
                _
            $region40: #{forward.1} parent=35 // pred_fallthru
              _
            // Predicated region
            $region48: #{forward.1} parent=35 // pred_check
              _
            $region49: #{forward.1} parent=35 // pred_check_branch
              %291 = sbr.rel target = $region51
            $region50: #{forward.1} parent=35 // pred_region
              _
            $region51: #{forward.1} parent=35 // pred_fallthru
              _
          $region36: #{forward.1} parent=31 // pred_fallthru
            _
          %292 = vnop
        $region32: #{forward.1} parent=27 // pred_fallthru
          _
        // Predicated region
        $region52: #{forward.1} parent=27 // pred_check
          %p293 = pneg %p78
        $region53: #{forward.1} parent=27 // pred_check_branch
          %295 = sbr.rel (%p293) target = $region55
        $region54: #{forward.1} parent=27 // pred_region
          %s296 = ssub.s32 1, %s21
          %s297 = smul.u32 %s22, %s296
          %s298 = sadd.s32 %s297, %s21
          %s299 = smul.u32 64, %s298
          %p300 = scmp.lt.s32.totalorder %s299, 127
          %s301 = scalar_select %p300, %s299, 127
          %s302 = smul.addr %s301, 4
          %s303 = scalar_lea.vmem %s1, %s302
          %s304 = ssub.s32 1, %s21
          %s305 = smul.u32 %s22, %s304
          %s306 = sadd.s32 %s305, %s21
          %s307 = smul.u32 64, %s306
        $region55: #{forward.1} parent=27 // pred_fallthru
          _
        // Predicated region
        $region56: #{forward.1} parent=27 // pred_check
          %p308 = pneg %p169
        $region57: #{forward.1} parent=27 // pred_check_branch
          %310 = sbr.rel (%p308) target = $region59
        $region58: #{forward.1} parent=27 // pred_region
          %s311 = sand.u32 %s159, 1
          %s312 = sand.u32 %s159, 1
          %s313 = smul.addr %s312, 256
          %s314 = scalar_lea.vmem [#allocation6], %s313
          %s315 = smul.u32 %s22, %s21
          %s316 = smul.u32 4, %s315
          %s317 = smul.addr %s316, 4
          %s318 = scalar_lea.vmem %s5, %s317
          // Predicated region
          $region60: #{forward.1} parent=58 // pred_check
            _
          $region61: #{forward.1} parent=58 // pred_check_branch
            %320 = sbr.rel (0) target = $region63
          $region62: #{forward.1} parent=58 // pred_region
            // Predicated region
            $region64: #{forward.1} parent=62 // pred_check
              _
            $region65: #{forward.1} parent=62 // pred_check_branch
              %322 = sbr.rel (0) target = $region67
            $region66: #{forward.1} parent=62 // pred_region
              loop: start=0, step=1, limit=1
              $region68: #{forward.1} parent=66 // loop_pre_header
                _
              $region69: #{forward.1} parent=66 // loop_header
                %s324 = sphi 0, %s328
                %p325 = scmp.ge.s32.totalorder %s324, 1
                %s329 = sphi %s318, %s318
                %s330 = sphi %s314, %s314
              $region70: #{forward.1} parent=66 // loop_header_branch
                %327 = sbr.rel (%p325) target = $region74
              $region71: #{forward.1} parent=66 // loop_body
                %v331 = vld [vmem:[%s329] sm:$0xff]
                %332 = vst [vmem:[%s330] sm:$0xff] %v331
                %v333 = vld [vmem:[%s329 + $0x8] sm:$0xff]
                %334 = vst [vmem:[%s330 + $0x8] sm:$0xff] %v333
                %v335 = vld [vmem:[%s329 + $0x20] sm:$0xff]
                %336 = vst [vmem:[%s330 + $0x10] sm:$0xff] %v335
                %v337 = vld [vmem:[%s329 + $0x28] sm:$0xff]
                %338 = vst [vmem:[%s330 + $0x18] sm:$0xff] %v337
                %v339 = vld [vmem:[%s329 + $0x40] sm:$0xff]
                %340 = vst [vmem:[%s330 + $0x20] sm:$0xff] %v339
                %v341 = vld [vmem:[%s329 + $0x48] sm:$0xff]
                %342 = vst [vmem:[%s330 + $0x28] sm:$0xff] %v341
                %v343 = vld [vmem:[%s329 + $0x60] sm:$0xff]
                %344 = vst [vmem:[%s330 + $0x30] sm:$0xff] %v343
                %v345 = vld [vmem:[%s329 + $0x68] sm:$0xff]
                %346 = vst [vmem:[%s330 + $0x38] sm:$0xff] %v345
                %v347 = vld [vmem:[%s329 + $0x80] sm:$0xff]
                %348 = vst [vmem:[%s330 + $0x40] sm:$0xff] %v347
                %v349 = vld [vmem:[%s329 + $0x88] sm:$0xff]
                %350 = vst [vmem:[%s330 + $0x48] sm:$0xff] %v349
                %v351 = vld [vmem:[%s329 + $0xa0] sm:$0xff]
                %352 = vst [vmem:[%s330 + $0x50] sm:$0xff] %v351
                %v353 = vld [vmem:[%s329 + $0xa8] sm:$0xff]
                %354 = vst [vmem:[%s330 + $0x58] sm:$0xff] %v353
                %v355 = vld [vmem:[%s329 + $0xc0] sm:$0xff]
                %356 = vst [vmem:[%s330 + $0x60] sm:$0xff] %v355
                %v357 = vld [vmem:[%s329 + $0xc8] sm:$0xff]
                %358 = vst [vmem:[%s330 + $0x68] sm:$0xff] %v357
                %v359 = vld [vmem:[%s329 + $0xe0] sm:$0xff]
                %360 = vst [vmem:[%s330 + $0x70] sm:$0xff] %v359
                %v361 = vld [vmem:[%s329 + $0xe8] sm:$0xff]
                %362 = vst [vmem:[%s330 + $0x78] sm:$0xff] %v361
                %v363 = vld [vmem:[%s329 + $0x100] sm:$0xff]
                %364 = vst [vmem:[%s330 + $0x80] sm:$0xff] %v363
                %v365 = vld [vmem:[%s329 + $0x108] sm:$0xff]
                %366 = vst [vmem:[%s330 + $0x88] sm:$0xff] %v365
                %v367 = vld [vmem:[%s329 + $0x120] sm:$0xff]
                %368 = vst [vmem:[%s330 + $0x90] sm:$0xff] %v367
                %v369 = vld [vmem:[%s329 + $0x128] sm:$0xff]
                %370 = vst [vmem:[%s330 + $0x98] sm:$0xff] %v369
                %v371 = vld [vmem:[%s329 + $0x140] sm:$0xff]
                %372 = vst [vmem:[%s330 + $0xa0] sm:$0xff] %v371
                %v373 = vld [vmem:[%s329 + $0x148] sm:$0xff]
                %374 = vst [vmem:[%s330 + $0xa8] sm:$0xff] %v373
                %v375 = vld [vmem:[%s329 + $0x160] sm:$0xff]
                %376 = vst [vmem:[%s330 + $0xb0] sm:$0xff] %v375
                %v377 = vld [vmem:[%s329 + $0x168] sm:$0xff]
                %378 = vst [vmem:[%s330 + $0xb8] sm:$0xff] %v377
                %v379 = vld [vmem:[%s329 + $0x180] sm:$0xff]
                %380 = vst [vmem:[%s330 + $0xc0] sm:$0xff] %v379
                %v381 = vld [vmem:[%s329 + $0x188] sm:$0xff]
                %382 = vst [vmem:[%s330 + $0xc8] sm:$0xff] %v381
                %v383 = vld [vmem:[%s329 + $0x1a0] sm:$0xff]
                %384 = vst [vmem:[%s330 + $0xd0] sm:$0xff] %v383
                %v385 = vld [vmem:[%s329 + $0x1a8] sm:$0xff]
                %386 = vst [vmem:[%s330 + $0xd8] sm:$0xff] %v385
                %v387 = vld [vmem:[%s329 + $0x1c0] sm:$0xff]
                %388 = vst [vmem:[%s330 + $0xe0] sm:$0xff] %v387
                %v389 = vld [vmem:[%s329 + $0x1c8] sm:$0xff]
                %390 = vst [vmem:[%s330 + $0xe8] sm:$0xff] %v389
                %v391 = vld [vmem:[%s329 + $0x1e0] sm:$0xff]
                %392 = vst [vmem:[%s330 + $0xf0] sm:$0xff] %v391
                %v393 = vld [vmem:[%s329 + $0x1e8] sm:$0xff]
                %394 = vst [vmem:[%s330 + $0xf8] sm:$0xff] %v393
              $region72: #{forward.1} parent=66 // loop_footer
                %s328 = sadd.s32 1, %s324
              $region73: #{forward.1} parent=66 // loop_footer_branch
                %323 = sbr.rel target = $region69
              $region74: #{forward.1} parent=66 // loop_exit
                _
            $region67: #{forward.1} parent=62 // pred_fallthru
              _
            // Predicated region
            $region75: #{forward.1} parent=62 // pred_check
              _
            $region76: #{forward.1} parent=62 // pred_check_branch
              %396 = sbr.rel target = $region78
            $region77: #{forward.1} parent=62 // pred_region
              _
            $region78: #{forward.1} parent=62 // pred_fallthru
              _
          $region63: #{forward.1} parent=58 // pred_fallthru
            _
          %397 = vnop
        $region59: #{forward.1} parent=27 // pred_fallthru
          _
        // Predicated region
        $region79: #{forward.1} parent=27 // pred_check
          %p398 = pneg %p197
        $region80: #{forward.1} parent=27 // pred_check_branch
          %400 = sbr.rel (%p398) target = $region82
        $region81: #{forward.1} parent=27 // pred_region
          %s401 = smul.u32 %s22, %s21
          %s402 = smul.u32 4, %s401
          %p403 = scmp.lt.s32.totalorder %s402, 7
          %s404 = scalar_select %p403, %s402, 7
          %s405 = scalar_lea.vmem %s6, %s404
          %s406 = smul.u32 %s22, %s21
          %s407 = smul.u32 4, %s406
        $region82: #{forward.1} parent=27 // pred_fallthru
          _
      $region28: #{forward.1} parent=5 // pred_fallthru
        _
      %p408 = scmp.le.s32.totalorder 1, %s14
      %p409 = scmp.lt.s32.totalorder %s14, 5
      %p410 = pnand %p408, %p409
      %p411 = pneg %p410
      // Predicated region
      $region83: #{forward.1} parent=5 // pred_check
        _
      $region84: #{forward.1} parent=5 // pred_check_branch
        %413 = sbr.rel (%p410) target = $region86
      $region85: #{forward.1} parent=5 // pred_region
        %s414 = ssub.s32 %s14, 1
        %s415 = sand.u32 %s39, 1
        %s416 = sand.u32 %s39, 1
        %s417 = smul.addr %s416, 64
        %s418 = scalar_lea.vmem [#allocation5], %s417
        // Predicated region
        $region87: #{forward.1} parent=85 // pred_check
          %p419 = pneg %p52
        $region88: #{forward.1} parent=85 // pred_check_branch
          %421 = sbr.rel (%p419) target = $region90
        $region89: #{forward.1} parent=85 // pred_region
          _
        $region90: #{forward.1} parent=85 // pred_fallthru
          _
        %s422 = sand.u32 %s162, 1
        %s423 = sand.u32 %s162, 1
        %s424 = smul.addr %s423, 256
        %s425 = scalar_lea.vmem [#allocation6], %s424
        // Predicated region
        $region91: #{forward.1} parent=85 // pred_check
          %p426 = pneg %p175
        $region92: #{forward.1} parent=85 // pred_check_branch
          %428 = sbr.rel (%p426) target = $region94
        $region93: #{forward.1} parent=85 // pred_region
          _
        $region94: #{forward.1} parent=85 // pred_fallthru
          _
        %s429 = sand.u32 %s39, 1
        %s430 = sand.u32 %s39, 1
        %s431 = smul.addr %s430, 64
        %s432 = scalar_lea.vmem [#allocation5], %s431
        %p433 = pneg %p52
        %p434 = pneg %p49
        %s435 = ssub.s32 1, %s23
        %s436 = smul.u32 %s24, %s435
        %s437 = sadd.s32 %s436, %s23
        %s438 = smul.u32 64, %s437
        %p439 = scmp.lt.s32.totalorder %s438, 127
        %s440 = scalar_select %p439, %s438, 127
        %s441 = smul.addr %s440, 4
        %s442 = scalar_lea.vmem %s1, %s441
        %p443 = pneg %p84
        %p444 = pneg %p81
        %p445 = pneg %p105
        %p446 = pneg %p102
        %p447 = pneg %p126
        %p448 = pneg %p123
        %p449 = pneg %p147
        %p450 = pneg %p144
        %s451 = sand.u32 %s162, 1
        %s452 = sand.u32 %s162, 1
        %s453 = smul.addr %s452, 256
        %s454 = scalar_lea.vmem [#allocation6], %s453
        %p455 = pneg %p175
        %p456 = pneg %p172
        %s457 = smul.u32 %s24, %s23
        %s458 = smul.u32 4, %s457
        %p459 = scmp.lt.s32.totalorder %s458, 7
        %s460 = scalar_select %p459, %s458, 7
        %s461 = scalar_lea.vmem %s6, %s460
        %p462 = pneg %p203
        %p463 = pneg %p200
        %p464 = pneg %p224
        %p465 = pneg %p221
        %s466 = smul.u32 4, %s24
        %s467 = ssub.s32 1, %s23
        %s468 = smul.u32 %s24, %s467
        %s469 = sadd.s32 %s468, %s23
        %s470 = smul.u32 64, %s469
        %p471 = scmp.lt.s32.totalorder %s470, 127
        %s472 = scalar_select %p471, %s470, 127
        %s473 = smul.addr %s472, 4
        %s474 = scalar_lea.vmem %s1, %s473
        %s475 = ssub.s32 1, %s23
        %s476 = smul.u32 %s24, %s475
        %s477 = sadd.s32 %s476, %s23
        %s478 = smul.u32 64, %s477
        %s479 = smul.u32 %s24, %s23
        %s480 = smul.u32 4, %s479
        %s481 = smul.u32 %s24, %s23
        %s482 = smul.u32 4, %s481
        %p483 = scmp.lt.s32.totalorder %s482, 7
        %s484 = scalar_select %p483, %s482, 7
        %s485 = scalar_lea.vmem %s6, %s484
        %s486 = smul.u32 %s24, %s23
        %s487 = smul.u32 4, %s486
        %p489 = scmp.eq.s32.totalorder %s23, 0
        %p490 = scmp.eq.s32.totalorder %s24, 0
        %p491 = pnand %p489, %p490
        %p492 = pneg %p491
        // Predicated region
        $region95: #{forward.1} parent=85 // pred_check
          _
        $region96: #{forward.1} parent=85 // pred_check_branch
          %494 = sbr.rel (%p491) target = $region98
        $region97: #{forward.1} parent=85 // pred_region
          %495 = vst [vmem:[#allocation2] sm:$0xff] 0.0
          %496 = vst [vmem:[#allocation2 + $0x8] sm:$0xff] 0.0
        $region98: #{forward.1} parent=85 // pred_fallthru
          _
        // Predicated region
        $region99: #{forward.1} parent=85 // pred_check
          %p497 = pneg %p489
        $region100: #{forward.1} parent=85 // pred_check_branch
          %499 = sbr.rel (%p497) target = $region102
        $region101: #{forward.1} parent=85 // pred_region
          %v500 = vld [vmem:[%s418] sm:$0xff]
          %v501 = vld [vmem:[%s418 + $0x8] sm:$0xff]
          %v502 = vld [vmem:[%s418 + $0x10] sm:$0xff]
          %v503 = vld [vmem:[%s418 + $0x18] sm:$0xff]
          %v504 = vld [vmem:[%s418 + $0x20] sm:$0xff]
          %v505 = vld [vmem:[%s418 + $0x28] sm:$0xff]
          %v506 = vld [vmem:[%s418 + $0x30] sm:$0xff]
          %v507 = vld [vmem:[%s418 + $0x38] sm:$0xff]
          %v508 = vpack.c.bf16 %v504, %v500
          %v509 = vpack.c.bf16 %v505, %v501
          %v510 = vpack.c.bf16 %v506, %v502
          %v511 = vpack.c.bf16 %v507, %v503
          %v512 = vld [vmem:[#allocation2] sm:$0xff]
          %v513 = vld [vmem:[#allocation2 + $0x8] sm:$0xff]
          %v514 = vld [vmem:[%s474] sm:$0xf]
          %v515 = vld [vmem:[%s474 + $0x4] sm:$0xf]
          %v516 = vld [vmem:[%s474 + $0x8] sm:$0xf]
          %v517 = vld [vmem:[%s474 + $0xc] sm:$0xf]
          %v518 = vld [vmem:[%s474 + $0x10] sm:$0xf]
          %v519 = vld [vmem:[%s474 + $0x14] sm:$0xf]
          %v520 = vld [vmem:[%s474 + $0x18] sm:$0xf]
          %v521 = vld [vmem:[%s474 + $0x1c] sm:$0xf]
          %v522 = vld [vmem:[%s474 + $0x20] sm:$0xf]
          %v523 = vld [vmem:[%s474 + $0x24] sm:$0xf]
          %v524 = vld [vmem:[%s474 + $0x28] sm:$0xf]
          %v525 = vld [vmem:[%s474 + $0x2c] sm:$0xf]
          %v526 = vld [vmem:[%s474 + $0x30] sm:$0xf]
          %v527 = vld [vmem:[%s474 + $0x34] sm:$0xf]
          %v528 = vld [vmem:[%s474 + $0x38] sm:$0xf]
          %v529 = vld [vmem:[%s474 + $0x3c] sm:$0xf]
          %v530 = vld [vmem:[%s474 + $0x40] sm:$0xf]
          %v531 = vld [vmem:[%s474 + $0x44] sm:$0xf]
          %v532 = vld [vmem:[%s474 + $0x48] sm:$0xf]
          %v533 = vld [vmem:[%s474 + $0x4c] sm:$0xf]
          %v534 = vld [vmem:[%s474 + $0x50] sm:$0xf]
          %v535 = vld [vmem:[%s474 + $0x54] sm:$0xf]
          %v536 = vld [vmem:[%s474 + $0x58] sm:$0xf]
          %v537 = vld [vmem:[%s474 + $0x5c] sm:$0xf]
          %v538 = vld [vmem:[%s474 + $0x60] sm:$0xf]
          %v539 = vld [vmem:[%s474 + $0x64] sm:$0xf]
          %v540 = vld [vmem:[%s474 + $0x68] sm:$0xf]
          %v541 = vld [vmem:[%s474 + $0x6c] sm:$0xf]
          %v542 = vld [vmem:[%s474 + $0x70] sm:$0xf]
          %v543 = vld [vmem:[%s474 + $0x74] sm:$0xf]
          %v544 = vld [vmem:[%s474 + $0x78] sm:$0xf]
          %v545 = vld [vmem:[%s474 + $0x7c] sm:$0xf]
          %v546 = vld [vmem:[%s474 + $0x80] sm:$0xf]
          %v547 = vld [vmem:[%s474 + $0x84] sm:$0xf]
          %v548 = vld [vmem:[%s474 + $0x88] sm:$0xf]
          %v549 = vld [vmem:[%s474 + $0x8c] sm:$0xf]
          %v550 = vld [vmem:[%s474 + $0x90] sm:$0xf]
          %v551 = vld [vmem:[%s474 + $0x94] sm:$0xf]
          %v552 = vld [vmem:[%s474 + $0x98] sm:$0xf]
          %v553 = vld [vmem:[%s474 + $0x9c] sm:$0xf]
          %v554 = vld [vmem:[%s474 + $0xa0] sm:$0xf]
          %v555 = vld [vmem:[%s474 + $0xa4] sm:$0xf]
          %v556 = vld [vmem:[%s474 + $0xa8] sm:$0xf]
          %v557 = vld [vmem:[%s474 + $0xac] sm:$0xf]
          %v558 = vld [vmem:[%s474 + $0xb0] sm:$0xf]
          %v559 = vld [vmem:[%s474 + $0xb4] sm:$0xf]
          %v560 = vld [vmem:[%s474 + $0xb8] sm:$0xf]
          %v561 = vld [vmem:[%s474 + $0xbc] sm:$0xf]
          %v562 = vld [vmem:[%s474 + $0xc0] sm:$0xf]
          %v563 = vld [vmem:[%s474 + $0xc4] sm:$0xf]
          %v564 = vld [vmem:[%s474 + $0xc8] sm:$0xf]
          %v565 = vld [vmem:[%s474 + $0xcc] sm:$0xf]
          %v566 = vld [vmem:[%s474 + $0xd0] sm:$0xf]
          %v567 = vld [vmem:[%s474 + $0xd4] sm:$0xf]
          %v568 = vld [vmem:[%s474 + $0xd8] sm:$0xf]
          %v569 = vld [vmem:[%s474 + $0xdc] sm:$0xf]
          %v570 = vld [vmem:[%s474 + $0xe0] sm:$0xf]
          %v571 = vld [vmem:[%s474 + $0xe4] sm:$0xf]
          %v572 = vld [vmem:[%s474 + $0xe8] sm:$0xf]
          %v573 = vld [vmem:[%s474 + $0xec] sm:$0xf]
          %v574 = vld [vmem:[%s474 + $0xf0] sm:$0xf]
          %v575 = vld [vmem:[%s474 + $0xf4] sm:$0xf]
          %v576 = vld [vmem:[%s474 + $0xf8] sm:$0xf]
          %v577 = vld [vmem:[%s474 + $0xfc] sm:$0xf]
          %v642 = vunpack.c.l.b16 %v514
          %v643 = vunpack.c.l.b16 %v515
          %v644 = vunpack.c.l.b16 %v516
          %v645 = vunpack.c.l.b16 %v517
          %v646 = vunpack.c.l.b16 %v518
          %v647 = vunpack.c.l.b16 %v519
          %v648 = vunpack.c.l.b16 %v520
          %v649 = vunpack.c.l.b16 %v521
          %v650 = vunpack.c.l.b16 %v522
          %v651 = vunpack.c.l.b16 %v523
          %v652 = vunpack.c.l.b16 %v524
          %v653 = vunpack.c.l.b16 %v525
          %v654 = vunpack.c.l.b16 %v526
          %v655 = vunpack.c.l.b16 %v527
          %v656 = vunpack.c.l.b16 %v528
          %v657 = vunpack.c.l.b16 %v529
          %v658 = vunpack.c.l.b16 %v530
          %v659 = vunpack.c.l.b16 %v531
          %v660 = vunpack.c.l.b16 %v532
          %v661 = vunpack.c.l.b16 %v533
          %v662 = vunpack.c.l.b16 %v534
          %v663 = vunpack.c.l.b16 %v535
          %v664 = vunpack.c.l.b16 %v536
          %v665 = vunpack.c.l.b16 %v537
          %v666 = vunpack.c.l.b16 %v538
          %v667 = vunpack.c.l.b16 %v539
          %v668 = vunpack.c.l.b16 %v540
          %v669 = vunpack.c.l.b16 %v541
          %v670 = vunpack.c.l.b16 %v542
          %v671 = vunpack.c.l.b16 %v543
          %v672 = vunpack.c.l.b16 %v544
          %v673 = vunpack.c.l.b16 %v545
          %v674 = vunpack.c.l.b16 %v546
          %v675 = vunpack.c.l.b16 %v547
          %v676 = vunpack.c.l.b16 %v548
          %v677 = vunpack.c.l.b16 %v549
          %v678 = vunpack.c.l.b16 %v550
          %v679 = vunpack.c.l.b16 %v551
          %v680 = vunpack.c.l.b16 %v552
          %v681 = vunpack.c.l.b16 %v553
          %v682 = vunpack.c.l.b16 %v554
          %v683 = vunpack.c.l.b16 %v555
          %v684 = vunpack.c.l.b16 %v556
          %v685 = vunpack.c.l.b16 %v557
          %v686 = vunpack.c.l.b16 %v558
          %v687 = vunpack.c.l.b16 %v559
          %v688 = vunpack.c.l.b16 %v560
          %v689 = vunpack.c.l.b16 %v561
          %v690 = vunpack.c.l.b16 %v562
          %v691 = vunpack.c.l.b16 %v563
          %v692 = vunpack.c.l.b16 %v564
          %v693 = vunpack.c.l.b16 %v565
          %v694 = vunpack.c.l.b16 %v566
          %v695 = vunpack.c.l.b16 %v567
          %v696 = vunpack.c.l.b16 %v568
          %v697 = vunpack.c.l.b16 %v569
          %v698 = vunpack.c.l.b16 %v570
          %v699 = vunpack.c.l.b16 %v571
          %v700 = vunpack.c.l.b16 %v572
          %v701 = vunpack.c.l.b16 %v573
          %v702 = vunpack.c.l.b16 %v574
          %v703 = vunpack.c.l.b16 %v575
          %v704 = vunpack.c.l.b16 %v576
          %v705 = vunpack.c.l.b16 %v577
          %v706 = vpack.c.b16 %v643, %v642
          %v707 = vpack.c.b16 %v645, %v644
          %v708 = vpack.c.b16 %v647, %v646
          %v709 = vpack.c.b16 %v649, %v648
          %v710 = vpack.c.b16 %v651, %v650
          %v711 = vpack.c.b16 %v653, %v652
          %v712 = vpack.c.b16 %v655, %v654
          %v713 = vpack.c.b16 %v657, %v656
          %v714 = vpack.c.b16 %v659, %v658
          %v715 = vpack.c.b16 %v661, %v660
          %v716 = vpack.c.b16 %v663, %v662
          %v717 = vpack.c.b16 %v665, %v664
          %v718 = vpack.c.b16 %v667, %v666
          %v719 = vpack.c.b16 %v669, %v668
          %v720 = vpack.c.b16 %v671, %v670
          %v721 = vpack.c.b16 %v673, %v672
          %v722 = vpack.c.b16 %v675, %v674
          %v723 = vpack.c.b16 %v677, %v676
          %v724 = vpack.c.b16 %v679, %v678
          %v725 = vpack.c.b16 %v681, %v680
          %v726 = vpack.c.b16 %v683, %v682
          %v727 = vpack.c.b16 %v685, %v684
          %v728 = vpack.c.b16 %v687, %v686
          %v729 = vpack.c.b16 %v689, %v688
          %v730 = vpack.c.b16 %v691, %v690
          %v731 = vpack.c.b16 %v693, %v692
          %v732 = vpack.c.b16 %v695, %v694
          %v733 = vpack.c.b16 %v697, %v696
          %v734 = vpack.c.b16 %v699, %v698
          %v735 = vpack.c.b16 %v701, %v700
          %v736 = vpack.c.b16 %v703, %v702
          %v737 = vpack.c.b16 %v705, %v704
          %770 = vmatprep.subr.bf16.mxu0 0
          %771 = vmatpush1.bf16.msra.mxu0 %v713
          %772 = vmatprep.subr.bf16.mxu0 0
          %773 = vmatpush1.bf16.msra.mxu0 %v712
          %774 = vmatprep.subr.bf16.mxu0 0
          %775 = vmatpush1.bf16.msra.mxu0 %v711
          %776 = vmatprep.subr.bf16.mxu0 0
          %777 = vmatpush1.bf16.msra.mxu0 %v710
          %778 = vmatprep.subr.bf16.mxu0 0
          %779 = vmatpush1.bf16.msra.mxu0 %v709
          %780 = vmatprep.subr.bf16.mxu0 0
          %781 = vmatpush1.bf16.msra.mxu0 %v708
          %782 = vmatprep.subr.bf16.mxu0 0
          %783 = vmatpush1.bf16.msra.mxu0 %v707
          %784 = vmatprep.subr.bf16.mxu0 0
          %785 = vmatpush1.bf16.msra.mxu0 %v706
          %786 = vmatprep.subr.bf16.mxu0 0
          %787 = vmatpush2.bf16.msra.mxu0 %v721
          %788 = vmatprep.subr.bf16.mxu0 0
          %789 = vmatpush2.bf16.msra.mxu0 %v720
          %790 = vmatprep.subr.bf16.mxu0 0
          %791 = vmatpush2.bf16.msra.mxu0 %v719
          %792 = vmatprep.subr.bf16.mxu0 0
          %793 = vmatpush2.bf16.msra.mxu0 %v718
          %794 = vmatprep.subr.bf16.mxu0 0
          %795 = vmatpush2.bf16.msra.mxu0 %v717
          %796 = vmatprep.subr.bf16.mxu0 0
          %797 = vmatpush2.bf16.msra.mxu0 %v716
          %798 = vmatprep.subr.bf16.mxu0 0
          %799 = vmatpush2.bf16.msra.mxu0 %v715
          %800 = vmatprep.subr.bf16.mxu0 0
          %801 = vmatpush2.bf16.msra.mxu0 %v714
          %802 = vmatprep.mubr.bf16.mxu0 %v509
          %803 = vmatmul.mubr.bf16.gmra.mxu0 %v508
          %v804 = vpop.f32.mrf.mxu0
          %v805 = vadd.f32 0.0, %v804
          %v806 = vpop.f32.mrf.mxu0
          %v807 = vpop.f32.mrf.mxu0
          %v808 = vadd.f32 0.0, %v807
          %v809 = vpop.f32.mrf.mxu0
          %810 = vdwg.mxu0
          %811 = vmatprep.subr.bf16.mxu0 0
          %812 = vmatpush1.bf16.msra.mxu0 %v729
          %813 = vmatprep.subr.bf16.mxu0 0
          %814 = vmatpush1.bf16.msra.mxu0 %v728
          %815 = vmatprep.subr.bf16.mxu0 0
          %816 = vmatpush1.bf16.msra.mxu0 %v727
          %817 = vmatprep.subr.bf16.mxu0 0
          %818 = vmatpush1.bf16.msra.mxu0 %v726
          %819 = vmatprep.subr.bf16.mxu0 0
          %820 = vmatpush1.bf16.msra.mxu0 %v725
          %821 = vmatprep.subr.bf16.mxu0 0
          %822 = vmatpush1.bf16.msra.mxu0 %v724
          %823 = vmatprep.subr.bf16.mxu0 0
          %824 = vmatpush1.bf16.msra.mxu0 %v723
          %825 = vmatprep.subr.bf16.mxu0 0
          %826 = vmatpush1.bf16.msra.mxu0 %v722
          %827 = vmatprep.subr.bf16.mxu0 0
          %828 = vmatpush2.bf16.msra.mxu0 %v737
          %829 = vmatprep.subr.bf16.mxu0 0
          %830 = vmatpush2.bf16.msra.mxu0 %v736
          %831 = vmatprep.subr.bf16.mxu0 0
          %832 = vmatpush2.bf16.msra.mxu0 %v735
          %833 = vmatprep.subr.bf16.mxu0 0
          %834 = vmatpush2.bf16.msra.mxu0 %v734
          %835 = vmatprep.subr.bf16.mxu0 0
          %836 = vmatpush2.bf16.msra.mxu0 %v733
          %837 = vmatprep.subr.bf16.mxu0 0
          %838 = vmatpush2.bf16.msra.mxu0 %v732
          %839 = vmatprep.subr.bf16.mxu0 0
          %840 = vmatpush2.bf16.msra.mxu0 %v731
          %841 = vmatprep.subr.bf16.mxu0 0
          %842 = vmatpush2.bf16.msra.mxu0 %v730
          %843 = vmatprep.mubr.bf16.mxu0 %v511
          %844 = vmatmul.mubr.bf16.gmra.mxu0 %v510
          %v845 = vpop.f32.mrf.mxu0
          %v846 = vadd.f32 %v805, %v845
          %v847 = vpop.f32.mrf.mxu0
          %v848 = vpop.f32.mrf.mxu0
          %v849 = vadd.f32 %v808, %v848
          %v850 = vpop.f32.mrf.mxu0
          %851 = vdwg.mxu0
          %v852 = vadd.f32 %v512, %v846
          %v853 = vadd.f32 %v513, %v849
          %854 = vst [vmem:[#allocation2] sm:$0xff] %v852
          %855 = vst [vmem:[#allocation2 + $0x8] sm:$0xff] %v853
        $region102: #{forward.1} parent=85 // pred_fallthru
          _
        %p856 = scmp.eq.s32.totalorder %s23, 1
        %p857 = pnand %p856, %p490
        %p858 = pneg %p857
        // Predicated region
        $region103: #{forward.1} parent=85 // pred_check
          _
        $region104: #{forward.1} parent=85 // pred_check_branch
          %860 = sbr.rel (%p857) target = $region106
        $region105: #{forward.1} parent=85 // pred_region
          %v861 = vld [vmem:[#allocation2] sm:$0xff]
          %v862 = vld [vmem:[#allocation2 + $0x8] sm:$0xff]
          %v863 = vld [vmem:[%s2] sm:$0x1]
          %v865 = vlaneseq
          %v866 = vshrl.u32 %v865, 7
          %v867 = vsub.s32 0, %v866
          %v868 = vrot.slane %v863, %v867
          %v870 = vadd.f32 %v861, %v868
          %v871 = vadd.f32 %v862, %v868
          %v872 = vpack.c.bf16 %v871, %v870
          %v874 = vunpack.c.l.b16 %v872
          %v875 = vunpack.c.h.b16 %v872
          %v876 = vpack.c.b16 %v874, %v874
          %v877 = vpack.c.b16 %v875, %v875
          %880 = vst [vmem:[#allocation3] sm:$0xf] %v876
          %881 = vst [vmem:[#allocation3 + $0x4] sm:$0xf] %v877
          %v882 = vld [vmem:[#allocation3] sm:$0xf]
          %v883 = vld [vmem:[#allocation3 + $0x4] sm:$0xf]
          %v884 = vld [vmem:[%s3] sm:$0xf]
          %v885 = vld [vmem:[%s3 + $0x4] sm:$0xf]
          %v886 = vld [vmem:[%s3 + $0x8] sm:$0xf]
          %v887 = vld [vmem:[%s3 + $0xc] sm:$0xf]
          %v888 = vld [vmem:[%s3 + $0x10] sm:$0xf]
          %v889 = vld [vmem:[%s3 + $0x14] sm:$0xf]
          %v890 = vld [vmem:[%s3 + $0x18] sm:$0xf]
          %v891 = vld [vmem:[%s3 + $0x1c] sm:$0xf]
          %v892 = vld [vmem:[%s3 + $0x20] sm:$0xf]
          %v893 = vld [vmem:[%s3 + $0x24] sm:$0xf]
          %v894 = vld [vmem:[%s3 + $0x28] sm:$0xf]
          %v895 = vld [vmem:[%s3 + $0x2c] sm:$0xf]
          %v896 = vld [vmem:[%s3 + $0x30] sm:$0xf]
          %v897 = vld [vmem:[%s3 + $0x34] sm:$0xf]
          %v898 = vld [vmem:[%s3 + $0x38] sm:$0xf]
          %v899 = vld [vmem:[%s3 + $0x3c] sm:$0xf]
          %v900 = vld [vmem:[%s4] sm:$0x1]
          %v902 = vlaneseq
          %v903 = vshrl.u32 %v902, 7
          %v904 = vsub.s32 0, %v903
          %v905 = vrot.slane %v900, %v904
          %v909 = vunpack.c.l.b16 %v882
          %v910 = vunpack.c.l.b16 %v883
          %v911 = vpack.c.b16 %v910, %v909
          %v929 = vunpack.c.l.b16 %v884
          %v930 = vunpack.c.l.b16 %v885
          %v931 = vunpack.c.l.b16 %v886
          %v932 = vunpack.c.l.b16 %v887
          %v933 = vunpack.c.l.b16 %v888
          %v934 = vunpack.c.l.b16 %v889
          %v935 = vunpack.c.l.b16 %v890
          %v936 = vunpack.c.l.b16 %v891
          %v937 = vunpack.c.l.b16 %v892
          %v938 = vunpack.c.l.b16 %v893
          %v939 = vunpack.c.l.b16 %v894
          %v940 = vunpack.c.l.b16 %v895
          %v941 = vunpack.c.l.b16 %v896
          %v942 = vunpack.c.l.b16 %v897
          %v943 = vunpack.c.l.b16 %v898
          %v944 = vunpack.c.l.b16 %v899
          %v945 = vpack.c.b16 %v930, %v929
          %v946 = vpack.c.b16 %v932, %v931
          %v947 = vpack.c.b16 %v934, %v933
          %v948 = vpack.c.b16 %v936, %v935
          %v949 = vpack.c.b16 %v938, %v937
          %v950 = vpack.c.b16 %v940, %v939
          %v951 = vpack.c.b16 %v942, %v941
          %v952 = vpack.c.b16 %v944, %v943
          %961 = vmatprep.subr.bf16.mxu0 0
          %962 = vmatpush1.bf16.msra.mxu0 %v952
          %963 = vmatprep.subr.bf16.mxu0 0
          %964 = vmatpush1.bf16.msra.mxu0 %v951
          %965 = vmatprep.subr.bf16.mxu0 0
          %966 = vmatpush1.bf16.msra.mxu0 %v950
          %967 = vmatprep.subr.bf16.mxu0 0
          %968 = vmatpush1.bf16.msra.mxu0 %v949
          %969 = vmatprep.subr.bf16.mxu0 0
          %970 = vmatpush1.bf16.msra.mxu0 %v948
          %971 = vmatprep.subr.bf16.mxu0 0
          %972 = vmatpush1.bf16.msra.mxu0 %v947
          %973 = vmatprep.subr.bf16.mxu0 0
          %974 = vmatpush1.bf16.msra.mxu0 %v946
          %975 = vmatprep.subr.bf16.mxu0 0
          %976 = vmatpush1.bf16.msra.mxu0 %v945
          %977 = vmatprep.subr.bf16.mxu0 0
          %978 = vmatpush2.bf16.msra.mxu0 0
          %979 = vmatprep.subr.bf16.mxu0 0
          %980 = vmatpush2.bf16.msra.mxu0 0
          %981 = vmatprep.subr.bf16.mxu0 0
          %982 = vmatpush2.bf16.msra.mxu0 0
          %983 = vmatprep.subr.bf16.mxu0 0
          %984 = vmatpush2.bf16.msra.mxu0 0
          %985 = vmatprep.subr.bf16.mxu0 0
          %986 = vmatpush2.bf16.msra.mxu0 0
          %987 = vmatprep.subr.bf16.mxu0 0
          %988 = vmatpush2.bf16.msra.mxu0 0
          %989 = vmatprep.subr.bf16.mxu0 0
          %990 = vmatpush2.bf16.msra.mxu0 0
          %991 = vmatprep.subr.bf16.mxu0 0
          %992 = vmatpush2.bf16.msra.mxu0 0
          %993 = vmatprep.mubr.bf16.mxu0 0
          %994 = vmatmul.mubr.bf16.gmra.mxu0 %v911
          %v995 = vpop.f32.mrf.mxu0
          %v996 = vadd.f32 %v905, %v995
          %v997 = vpop.f32.mrf.mxu0
          %v998 = vpop.f32.mrf.mxu0
          %v999 = vadd.f32 %v905, %v998
          %v1000 = vpop.f32.mrf.mxu0
          %1001 = vdwg.mxu0
          %v1002 = vmul.f32 %v996, %v996
          %v1003 = vmul.f32 %v999, %v999
          %1004 = vadd.xlane.f32.xlu0 %v1002
          %v1005 = vpop.xlane.xlu0 %1004
          %1006 = vadd.xlane.f32.xlu0 %v1003
          %v1007 = vpop.xlane.xlu0 %1006
          %v1008 = vmax.f32 %v1005, 1e-16
          %v1009 = vmax.f32 %v1007, 1e-16
          %v1010 = vrsqrt.pop %v1008
          %v1011 = vrsqrt.pop %v1009
          %v1012 = vmul.f32 %v996, %v1010
          %v1013 = vmul.f32 %v999, %v1011
          %1014 = vmatprep.subr.mxu0 0.0
          %1015 = vmatpush1.xpose.msra.mxu0 0.0
          %1016 = vmatprep.subr.mxu0 0.0
          %1017 = vmatpush1.xpose.msra.mxu0 0.0
          %1018 = vmatprep.subr.mxu0 0.0
          %1019 = vmatpush1.xpose.msra.mxu0 0.0
          %1020 = vmatprep.subr.mxu0 0.0
          %1021 = vmatpush1.xpose.msra.mxu0 0.0
          %1022 = vmatprep.subr.mxu0 0.0
          %1023 = vmatpush1.xpose.msra.mxu0 0.0
          %1024 = vmatprep.subr.mxu0 0.0
          %1025 = vmatpush1.xpose.msra.mxu0 0.0
          %1026 = vmatprep.subr.mxu0 0.0
          %1027 = vmatpush1.xpose.msra.mxu0 0.0
          %1028 = vmatprep.subr.mxu0 0.0
          %1029 = vmatpush1.xpose.msra.mxu0 0.0
          %1030 = vmatprep.subr.mxu0 0.0
          %1031 = vmatpush1.xpose.msra.mxu0 0.0
          %1032 = vmatprep.subr.mxu0 0.0
          %1033 = vmatpush1.xpose.msra.mxu0 0.0
          %1034 = vmatprep.subr.mxu0 0.0
          %1035 = vmatpush1.xpose.msra.mxu0 0.0
          %1036 = vmatprep.subr.mxu0 0.0
          %1037 = vmatpush1.xpose.msra.mxu0 0.0
          %1038 = vmatprep.subr.mxu0 0.0
          %1039 = vmatpush1.xpose.msra.mxu0 0.0
          %1040 = vmatprep.subr.mxu0 0.0
          %1041 = vmatpush1.xpose.msra.mxu0 0.0
          %1042 = vmatprep.subr.mxu0 0.0
          %1043 = vmatpush1.xpose.msra.mxu0 %v1013
          %1044 = vmatprep.subr.mxu0 0.0
          %1045 = vmatpush1.xpose.msra.mxu0 %v1012
          %1046 = vmatprep.subr.mxu0 0.0
          %1047 = vmatpush2.xpose.msra.mxu0 0.0
          %1048 = vmatprep.subr.mxu0 0.0
          %1049 = vmatpush2.xpose.msra.mxu0 0.0
          %1050 = vmatprep.subr.mxu0 0.0
          %1051 = vmatpush2.xpose.msra.mxu0 0.0
          %1052 = vmatprep.subr.mxu0 0.0
          %1053 = vmatpush2.xpose.msra.mxu0 0.0
          %1054 = vmatprep.subr.mxu0 0.0
          %1055 = vmatpush2.xpose.msra.mxu0 0.0
          %1056 = vmatprep.subr.mxu0 0.0
          %1057 = vmatpush2.xpose.msra.mxu0 0.0
          %1058 = vmatprep.subr.mxu0 0.0
          %1059 = vmatpush2.xpose.msra.mxu0 0.0
          %1060 = vmatprep.subr.mxu0 0.0
          %1061 = vmatpush2.xpose.msra.mxu0 0.0
          %1062 = vmatprep.subr.mxu0 0.0
          %1063 = vmatpush2.xpose.msra.mxu0 0.0
          %1064 = vmatprep.subr.mxu0 0.0
          %1065 = vmatpush2.xpose.msra.mxu0 0.0
          %1066 = vmatprep.subr.mxu0 0.0
          %1067 = vmatpush2.xpose.msra.mxu0 0.0
          %1068 = vmatprep.subr.mxu0 0.0
          %1069 = vmatpush2.xpose.msra.mxu0 0.0
          %1070 = vmatprep.subr.mxu0 0.0
          %1071 = vmatpush2.xpose.msra.mxu0 0.0
          %1072 = vmatprep.subr.mxu0 0.0
          %1073 = vmatpush2.xpose.msra.mxu0 0.0
          %1074 = vmatprep.subr.mxu0 0.0
          %1075 = vmatpush2.xpose.msra.mxu0 0.0
          %1076 = vmatprep.subr.mxu0 0.0
          %1077 = vmatpush2.xpose.msra.mxu0 0.0
          %1078 = vmatprep.mubr.f32.mxu0 0.0
          %1079 = vmatmul.mubr.f32.gmra.mxu0 %v1012
          %v1080 = vpop.f32.mrf.mxu0
          %v1081 = vadd.f32 0.0, %v1080
          %v1082 = vpop.f32.mrf.mxu0
          %1083 = vmatprep.mubr.f32.mxu0 0.0
          %1084 = vmatmul.mubr.f32.gmra.mxu0 %v1013
          %v1085 = vpop.f32.mrf.mxu0
          %v1086 = vadd.f32 0.0, %v1085
          %v1087 = vpop.f32.mrf.mxu0
          %1088 = vdwg.mxu0
          %v1089 = vmul.f32 %v1081, 2.0
          %v1090 = vmul.f32 %v1086, 2.0
          %v1091 = vlaneseq
          %v1092 = vshrl.u32 %v1091, 7
          %v1093 = vadd.s32 %v1092, 8
          %v1094 = vlaneseq
          %v1095 = vand.u32 %v1094, 127
          %v1096 = vsub.s32 %v1092, %v1095
          %v1097 = vsub.s32 %v1093, %v1095
          %vm1098 = vcmp.eq.s32.totalorder %v1096, 0
          %vm1099 = vcmp.eq.s32.totalorder %v1097, 0
          %vm1100 = vcmp.eq.s32.totalorder %v1096, 8
          %vm1101 = vcmp.eq.s32.totalorder %v1097, 8
          %vm1102 = vcmp.eq.s32.totalorder %v1096, 4294967288
          %vm1103 = vcmp.eq.s32.totalorder %v1097, 4294967288
          %vm1104 = vmor %vm1100, %vm1102
          %vm1105 = vmor %vm1101, %vm1103
          %vm1106 = vmor %vm1098, %vm1104
          %vm1107 = vmor %vm1099, %vm1105
          %vm1108 = vcmp.ne.s32.totalorder %v1096, 0
          %vm1109 = vcmp.ne.s32.totalorder %v1097, 0
          %vm1110 = vmand %vm1106, %vm1108
          %vm1111 = vmand %vm1107, %vm1109
          %vm1112 = vcmask 130048
          %v1113 = vsel %vm1112, %v1089, -inf
          %1114 = vmax.xlane.f32.xlu0 %v1113
          %v1115 = vpop.xlane.xlu0 %1114
          %v1116 = vsel %vm1112, %v1090, -inf
          %1117 = vmax.xlane.f32.xlu0 %v1116
          %v1118 = vpop.xlane.xlu0 %1117
          %v1119 = vsub.f32 %v1089, %v1115
          %v1120 = vsub.f32 %v1090, %v1118
          %v1121 = vmul.f32 %v1119, 1.442695
          %v1122 = vpow.pop %v1121
          %v1123 = vmul.f32 %v1120, 1.442695
          %v1124 = vpow.pop %v1123
          %v1125 = vsel %vm1106, 0.0, %v1122
          %v1126 = vsel %vm1107, 0.0, %v1124
          %v1127 = vsel %vm1112, %v1125, 0.0
          %1128 = vadd.xlane.f32.xlu0 %v1127
          %v1129 = vpop.xlane.xlu0 %1128
          %v1130 = vsel %vm1112, %v1126, 0.0
          %1131 = vadd.xlane.f32.xlu0 %v1130
          %v1132 = vpop.xlane.xlu0 %1131
          %v1133 = vrcp.pop %v1122
          %v1134 = vmul.f32 %v1129, %v1133
          %v1135 = vrcp.pop %v1124
          %v1136 = vmul.f32 %v1132, %v1135
          %v1137 = vadd.f32 %v1134, 1.0
          %v1138 = vlog2.pop %v1137
          %v1139 = vmul.f32 %v1138, 0.6931472
          %v1140 = vmul.f32 -0.5, %v1134
          %v1141 = vadd.f32 %v1140, 1.0
          %v1142 = vmul.f32 %v1141, %v1134
          %v1143 = vand.u32 2147483647, %v1134
          %vm1144 = vcmp.lt.f32.partialorder %v1143, 0.0004427343
          %v1145 = vsel %vm1144, %v1142, %v1139
          %v1146 = vadd.f32 %v1136, 1.0
          %v1147 = vlog2.pop %v1146
          %v1148 = vmul.f32 %v1147, 0.6931472
          %v1149 = vmul.f32 -0.5, %v1136
          %v1150 = vadd.f32 %v1149, 1.0
          %v1151 = vmul.f32 %v1150, %v1136
          %v1152 = vand.u32 2147483647, %v1136
          %vm1153 = vcmp.lt.f32.partialorder %v1152, 0.0004427343
          %v1154 = vsel %vm1153, %v1151, %v1148
          %v1155 = vsel %vm1110, %v1145, 0.0
          %v1156 = vsel %vm1111, %v1154, 0.0
          %v1157 = vsel %vm1112, %v1155, 0.0
          %v1158 = vsel %vm1112, %v1156, 0.0
          %v1159 = vadd.f32 %v1157, %v1158
          %1160 = vadd.xlane.f32.xlu0 %v1159
          %v1161 = vpop.xlane.xlu0 %1160
          %v1162 = vrot.slane %v1161, 4
          %v1163 = vadd.f32 %v1161, %v1162
          %v1164 = vrot.slane %v1163, 2
          %v1165 = vadd.f32 %v1163, %v1164
          %v1166 = vrot.slane %v1165, 1
          %v1167 = vadd.f32 %v1165, %v1166
          %s1168 = vtos %v1167
          %s1169 = smul.f32 %s1168, 0.0625
          %s1170 = scalar_lea.smem [#allocation4], 1
          %1171 = sst [smem:[%s1170]] %s1169
          %s1172 = scalar_lea.smem [#allocation4], 0
          %1173 = sst [smem:[%s1172]] 0.0
        $region106: #{forward.1} parent=85 // pred_fallthru
          _
        // Predicated region
        $region107: #{forward.1} parent=85 // pred_check
          %p1174 = pneg %p856
        $region108: #{forward.1} parent=85 // pred_check_branch
          %1176 = sbr.rel (%p1174) target = $region110
        $region109: #{forward.1} parent=85 // pred_region
          %v1177 = vld [vmem:[#allocation3] sm:$0xf]
          %v1178 = vld [vmem:[#allocation3 + $0x4] sm:$0xf]
          %v1179 = vld [vmem:[%s425] sm:$0xff]
          %v1180 = vld [vmem:[%s425 + $0x8] sm:$0xff]
          %v1181 = vld [vmem:[%s425 + $0x10] sm:$0xff]
          %v1182 = vld [vmem:[%s425 + $0x18] sm:$0xff]
          %v1183 = vld [vmem:[%s425 + $0x20] sm:$0xff]
          %v1184 = vld [vmem:[%s425 + $0x28] sm:$0xff]
          %v1185 = vld [vmem:[%s425 + $0x30] sm:$0xff]
          %v1186 = vld [vmem:[%s425 + $0x38] sm:$0xff]
          %v1187 = vld [vmem:[%s425 + $0x40] sm:$0xff]
          %v1188 = vld [vmem:[%s425 + $0x48] sm:$0xff]
          %v1189 = vld [vmem:[%s425 + $0x50] sm:$0xff]
          %v1190 = vld [vmem:[%s425 + $0x58] sm:$0xff]
          %v1191 = vld [vmem:[%s425 + $0x60] sm:$0xff]
          %v1192 = vld [vmem:[%s425 + $0x68] sm:$0xff]
          %v1193 = vld [vmem:[%s425 + $0x70] sm:$0xff]
          %v1194 = vld [vmem:[%s425 + $0x78] sm:$0xff]
          %v1195 = vld [vmem:[%s425 + $0x80] sm:$0xff]
          %v1196 = vld [vmem:[%s425 + $0x88] sm:$0xff]
          %v1197 = vld [vmem:[%s425 + $0x90] sm:$0xff]
          %v1198 = vld [vmem:[%s425 + $0x98] sm:$0xff]
          %v1199 = vld [vmem:[%s425 + $0xa0] sm:$0xff]
          %v1200 = vld [vmem:[%s425 + $0xa8] sm:$0xff]
          %v1201 = vld [vmem:[%s425 + $0xb0] sm:$0xff]
          %v1202 = vld [vmem:[%s425 + $0xb8] sm:$0xff]
          %v1203 = vld [vmem:[%s425 + $0xc0] sm:$0xff]
          %v1204 = vld [vmem:[%s425 + $0xc8] sm:$0xff]
          %v1205 = vld [vmem:[%s425 + $0xd0] sm:$0xff]
          %v1206 = vld [vmem:[%s425 + $0xd8] sm:$0xff]
          %v1207 = vld [vmem:[%s425 + $0xe0] sm:$0xff]
          %v1208 = vld [vmem:[%s425 + $0xe8] sm:$0xff]
          %v1209 = vld [vmem:[%s425 + $0xf0] sm:$0xff]
          %v1210 = vld [vmem:[%s425 + $0xf8] sm:$0xff]
          %v1211 = vld [vmem:[%s485] sm:$0xf]
          %v1213 = vlaneseq
          %v1214 = vshrl.u32 %v1213, 7
          %v1215 = vsub.s32 0, %v1214
          %v1216 = vrot.slane %v1211, %v1215
          %v1217 = vlaneseq
          %v1218 = vshrl.u32 %v1217, 7
          %v1219 = vsub.s32 1, %v1218
          %v1220 = vrot.slane %v1211, %v1219
          %v1221 = vlaneseq
          %v1222 = vshrl.u32 %v1221, 7
          %v1223 = vsub.s32 2, %v1222
          %v1224 = vrot.slane %v1211, %v1223
          %v1225 = vlaneseq
          %v1226 = vshrl.u32 %v1225, 7
          %v1227 = vsub.s32 3, %v1226
          %v1228 = vrot.slane %v1211, %v1227
          %v1235 = vunpack.c.l.b16 %v1177
          %v1236 = vunpack.c.l.b16 %v1178
          %v1237 = vpack.c.b16 %v1236, %v1235
          %v1271 = vunpack.c.l.b16 %v1179
          %v1272 = vunpack.c.h.b16 %v1179
          %v1273 = vunpack.c.l.b16 %v1180
          %v1274 = vunpack.c.h.b16 %v1180
          %v1275 = vunpack.c.l.b16 %v1181
          %v1276 = vunpack.c.h.b16 %v1181
          %v1277 = vunpack.c.l.b16 %v1182
          %v1278 = vunpack.c.h.b16 %v1182
          %v1279 = vunpack.c.l.b16 %v1183
          %v1280 = vunpack.c.h.b16 %v1183
          %v1281 = vunpack.c.l.b16 %v1184
          %v1282 = vunpack.c.h.b16 %v1184
          %v1283 = vunpack.c.l.b16 %v1185
          %v1284 = vunpack.c.h.b16 %v1185
          %v1285 = vunpack.c.l.b16 %v1186
          %v1286 = vunpack.c.h.b16 %v1186
          %v1287 = vunpack.c.l.b16 %v1187
          %v1288 = vunpack.c.h.b16 %v1187
          %v1289 = vunpack.c.l.b16 %v1188
          %v1290 = vunpack.c.h.b16 %v1188
          %v1291 = vunpack.c.l.b16 %v1189
          %v1292 = vunpack.c.h.b16 %v1189
          %v1293 = vunpack.c.l.b16 %v1190
          %v1294 = vunpack.c.h.b16 %v1190
          %v1295 = vunpack.c.l.b16 %v1191
          %v1296 = vunpack.c.h.b16 %v1191
          %v1297 = vunpack.c.l.b16 %v1192
          %v1298 = vunpack.c.h.b16 %v1192
          %v1299 = vunpack.c.l.b16 %v1193
          %v1300 = vunpack.c.h.b16 %v1193
          %v1301 = vunpack.c.l.b16 %v1194
          %v1302 = vunpack.c.h.b16 %v1194
          %v1303 = vunpack.c.l.b16 %v1195
          %v1304 = vunpack.c.h.b16 %v1195
          %v1305 = vunpack.c.l.b16 %v1196
          %v1306 = vunpack.c.h.b16 %v1196
          %v1307 = vunpack.c.l.b16 %v1197
          %v1308 = vunpack.c.h.b16 %v1197
          %v1309 = vunpack.c.l.b16 %v1198
          %v1310 = vunpack.c.h.b16 %v1198
          %v1311 = vunpack.c.l.b16 %v1199
          %v1312 = vunpack.c.h.b16 %v1199
          %v1313 = vunpack.c.l.b16 %v1200
          %v1314 = vunpack.c.h.b16 %v1200
          %v1315 = vunpack.c.l.b16 %v1201
          %v1316 = vunpack.c.h.b16 %v1201
          %v1317 = vunpack.c.l.b16 %v1202
          %v1318 = vunpack.c.h.b16 %v1202
          %v1319 = vunpack.c.l.b16 %v1203
          %v1320 = vunpack.c.h.b16 %v1203
          %v1321 = vunpack.c.l.b16 %v1204
          %v1322 = vunpack.c.h.b16 %v1204
          %v1323 = vunpack.c.l.b16 %v1205
          %v1324 = vunpack.c.h.b16 %v1205
          %v1325 = vunpack.c.l.b16 %v1206
          %v1326 = vunpack.c.h.b16 %v1206
          %v1327 = vunpack.c.l.b16 %v1207
          %v1328 = vunpack.c.h.b16 %v1207
          %v1329 = vunpack.c.l.b16 %v1208
          %v1330 = vunpack.c.h.b16 %v1208
          %v1331 = vunpack.c.l.b16 %v1209
          %v1332 = vunpack.c.h.b16 %v1209
          %v1333 = vunpack.c.l.b16 %v1210
          %v1334 = vunpack.c.h.b16 %v1210
          %v1335 = vpack.c.b16 %v1275, %v1271
          %v1336 = vpack.c.b16 %v1276, %v1272
          %v1337 = vpack.c.b16 %v1277, %v1273
          %v1338 = vpack.c.b16 %v1278, %v1274
          %v1339 = vpack.c.b16 %v1283, %v1279
          %v1340 = vpack.c.b16 %v1284, %v1280
          %v1341 = vpack.c.b16 %v1285, %v1281
          %v1342 = vpack.c.b16 %v1286, %v1282
          %v1343 = vpack.c.b16 %v1291, %v1287
          %v1344 = vpack.c.b16 %v1292, %v1288
          %v1345 = vpack.c.b16 %v1293, %v1289
          %v1346 = vpack.c.b16 %v1294, %v1290
          %v1347 = vpack.c.b16 %v1299, %v1295
          %v1348 = vpack.c.b16 %v1300, %v1296
          %v1349 = vpack.c.b16 %v1301, %v1297
          %v1350 = vpack.c.b16 %v1302, %v1298
          %v1351 = vpack.c.b16 %v1307, %v1303
          %v1352 = vpack.c.b16 %v1308, %v1304
          %v1353 = vpack.c.b16 %v1309, %v1305
          %v1354 = vpack.c.b16 %v1310, %v1306
          %v1355 = vpack.c.b16 %v1315, %v1311
          %v1356 = vpack.c.b16 %v1316, %v1312
          %v1357 = vpack.c.b16 %v1317, %v1313
          %v1358 = vpack.c.b16 %v1318, %v1314
          %v1359 = vpack.c.b16 %v1323, %v1319
          %v1360 = vpack.c.b16 %v1324, %v1320
          %v1361 = vpack.c.b16 %v1325, %v1321
          %v1362 = vpack.c.b16 %v1326, %v1322
          %v1363 = vpack.c.b16 %v1331, %v1327
          %v1364 = vpack.c.b16 %v1332, %v1328
          %v1365 = vpack.c.b16 %v1333, %v1329
          %v1366 = vpack.c.b16 %v1334, %v1330
          %1399 = vmatprep.subr.bf16.mxu0 %v1364
          %1400 = vmatpush1.bf16.msra.mxu0 %v1363
          %1401 = vmatprep.subr.bf16.mxu0 %v1360
          %1402 = vmatpush1.bf16.msra.mxu0 %v1359
          %1403 = vmatprep.subr.bf16.mxu0 %v1356
          %1404 = vmatpush1.bf16.msra.mxu0 %v1355
          %1405 = vmatprep.subr.bf16.mxu0 %v1352
          %1406 = vmatpush1.bf16.msra.mxu0 %v1351
          %1407 = vmatprep.subr.bf16.mxu0 %v1348
          %1408 = vmatpush1.bf16.msra.mxu0 %v1347
          %1409 = vmatprep.subr.bf16.mxu0 %v1344
          %1410 = vmatpush1.bf16.msra.mxu0 %v1343
          %1411 = vmatprep.subr.bf16.mxu0 %v1340
          %1412 = vmatpush1.bf16.msra.mxu0 %v1339
          %1413 = vmatprep.subr.bf16.mxu0 %v1336
          %1414 = vmatpush1.bf16.msra.mxu0 %v1335
          %1415 = vmatprep.subr.bf16.mxu0 0
          %1416 = vmatpush2.bf16.msra.mxu0 0
          %1417 = vmatprep.subr.bf16.mxu0 0
          %1418 = vmatpush2.bf16.msra.mxu0 0
          %1419 = vmatprep.subr.bf16.mxu0 0
          %1420 = vmatpush2.bf16.msra.mxu0 0
          %1421 = vmatprep.subr.bf16.mxu0 0
          %1422 = vmatpush2.bf16.msra.mxu0 0
          %1423 = vmatprep.subr.bf16.mxu0 0
          %1424 = vmatpush2.bf16.msra.mxu0 0
          %1425 = vmatprep.subr.bf16.mxu0 0
          %1426 = vmatpush2.bf16.msra.mxu0 0
          %1427 = vmatprep.subr.bf16.mxu0 0
          %1428 = vmatpush2.bf16.msra.mxu0 0
          %1429 = vmatprep.subr.bf16.mxu0 0
          %1430 = vmatpush2.bf16.msra.mxu0 0
          %1431 = vmatprep.mubr.bf16.mxu0 0
          %1432 = vmatmul.mubr.bf16.gmra.mxu0 %v1237
          %v1433 = vpop.f32.mrf.mxu0
          %v1434 = vadd.f32 %v1216, %v1433
          %v1435 = vpop.f32.mrf.mxu0
          %v1436 = vadd.f32 %v1220, %v1435
          %v1437 = vpop.f32.mrf.mxu0
          %v1438 = vadd.f32 %v1216, %v1437
          %v1439 = vpop.f32.mrf.mxu0
          %v1440 = vadd.f32 %v1220, %v1439
          %1441 = vdwg.mxu0
          %1442 = vmatprep.subr.bf16.mxu0 %v1366
          %1443 = vmatpush1.bf16.msra.mxu0 %v1365
          %1444 = vmatprep.subr.bf16.mxu0 %v1362
          %1445 = vmatpush1.bf16.msra.mxu0 %v1361
          %1446 = vmatprep.subr.bf16.mxu0 %v1358
          %1447 = vmatpush1.bf16.msra.mxu0 %v1357
          %1448 = vmatprep.subr.bf16.mxu0 %v1354
          %1449 = vmatpush1.bf16.msra.mxu0 %v1353
          %1450 = vmatprep.subr.bf16.mxu0 %v1350
          %1451 = vmatpush1.bf16.msra.mxu0 %v1349
          %1452 = vmatprep.subr.bf16.mxu0 %v1346
          %1453 = vmatpush1.bf16.msra.mxu0 %v1345
          %1454 = vmatprep.subr.bf16.mxu0 %v1342
          %1455 = vmatpush1.bf16.msra.mxu0 %v1341
          %1456 = vmatprep.subr.bf16.mxu0 %v1338
          %1457 = vmatpush1.bf16.msra.mxu0 %v1337
          %1458 = vmatprep.subr.bf16.mxu0 0
          %1459 = vmatpush2.bf16.msra.mxu0 0
          %1460 = vmatprep.subr.bf16.mxu0 0
          %1461 = vmatpush2.bf16.msra.mxu0 0
          %1462 = vmatprep.subr.bf16.mxu0 0
          %1463 = vmatpush2.bf16.msra.mxu0 0
          %1464 = vmatprep.subr.bf16.mxu0 0
          %1465 = vmatpush2.bf16.msra.mxu0 0
          %1466 = vmatprep.subr.bf16.mxu0 0
          %1467 = vmatpush2.bf16.msra.mxu0 0
          %1468 = vmatprep.subr.bf16.mxu0 0
          %1469 = vmatpush2.bf16.msra.mxu0 0
          %1470 = vmatprep.subr.bf16.mxu0 0
          %1471 = vmatpush2.bf16.msra.mxu0 0
          %1472 = vmatprep.subr.bf16.mxu0 0
          %1473 = vmatpush2.bf16.msra.mxu0 0
          %1474 = vmatprep.mubr.bf16.mxu0 0
          %1475 = vmatmul.mubr.bf16.gmra.mxu0 %v1237
          %v1476 = vpop.f32.mrf.mxu0
          %v1477 = vadd.f32 %v1224, %v1476
          %v1478 = vpop.f32.mrf.mxu0
          %v1479 = vadd.f32 %v1228, %v1478
          %v1480 = vpop.f32.mrf.mxu0
          %v1481 = vadd.f32 %v1224, %v1480
          %v1482 = vpop.f32.mrf.mxu0
          %v1483 = vadd.f32 %v1228, %v1482
          %1484 = vdwg.mxu0
          %v1485 = vld [vmem:[%s418] sm:$0xff]
          %v1486 = vld [vmem:[%s418 + $0x8] sm:$0xff]
          %v1487 = vld [vmem:[%s418 + $0x10] sm:$0xff]
          %v1488 = vld [vmem:[%s418 + $0x18] sm:$0xff]
          %v1489 = vld [vmem:[%s418 + $0x20] sm:$0xff]
          %v1490 = vld [vmem:[%s418 + $0x28] sm:$0xff]
          %v1491 = vld [vmem:[%s418 + $0x30] sm:$0xff]
          %v1492 = vld [vmem:[%s418 + $0x38] sm:$0xff]
          %s1493 = sld [smem:[#allocation4]]
          %v1494 = vsub.f32 %v1489, %v1434
          %v1495 = vsub.f32 %v1490, %v1436
          %v1496 = vsub.f32 %v1491, %v1477
          %v1497 = vsub.f32 %v1492, %v1479
          %v1498 = vmul.f32 %v1494, %v1494
          %v1499 = vmul.f32 %v1495, %v1495
          %v1500 = vmul.f32 %v1496, %v1496
          %v1501 = vmul.f32 %v1497, %v1497
          %v1502 = vadd.f32 %v1498, %v1499
          %v1503 = vadd.f32 %v1502, %v1500
          %v1504 = vadd.f32 %v1503, %v1501
          %1505 = vadd.xlane.f32.xlu0 %v1504
          %v1506 = vpop.xlane.xlu0 %1505
          %v1507 = vrot.slane %v1506, 4
          %v1508 = vadd.f32 %v1506, %v1507
          %v1509 = vrot.slane %v1508, 2
          %v1510 = vadd.f32 %v1508, %v1509
          %v1511 = vrot.slane %v1510, 1
          %v1512 = vadd.f32 %v1510, %v1511
          %s1513 = vtos %v1512
          %s1514 = sadd.f32 %s1493, %s1513
          %v1515 = vsub.f32 %v1485, %v1438
          %v1516 = vsub.f32 %v1486, %v1440
          %v1517 = vsub.f32 %v1487, %v1481
          %v1518 = vsub.f32 %v1488, %v1483
          %v1519 = vmul.f32 %v1515, %v1515
          %v1520 = vmul.f32 %v1516, %v1516
          %v1521 = vmul.f32 %v1517, %v1517
          %v1522 = vmul.f32 %v1518, %v1518
          %v1523 = vadd.f32 %v1519, %v1520
          %v1524 = vadd.f32 %v1523, %v1521
          %v1525 = vadd.f32 %v1524, %v1522
          %1526 = vadd.xlane.f32.xlu0 %v1525
          %v1527 = vpop.xlane.xlu0 %1526
          %v1528 = vrot.slane %v1527, 4
          %v1529 = vadd.f32 %v1527, %v1528
          %v1530 = vrot.slane %v1529, 2
          %v1531 = vadd.f32 %v1529, %v1530
          %v1532 = vrot.slane %v1531, 1
          %v1533 = vadd.f32 %v1531, %v1532
          %s1534 = vtos %v1533
          %s1535 = sadd.f32 %s1514, %s1534
          %s1536 = scalar_lea.smem [#allocation4], 0
          %1537 = sst [smem:[%s1536]] %s1535
        $region110: #{forward.1} parent=85 // pred_fallthru
          _
        %p1538 = scmp.eq.s32.totalorder %s24, 1
        %p1539 = pnand %p856, %p1538
        %p1540 = pneg %p1539
        // Predicated region
        $region111: #{forward.1} parent=85 // pred_check
          _
        $region112: #{forward.1} parent=85 // pred_check_branch
          %1542 = sbr.rel (%p1539) target = $region114
        $region113: #{forward.1} parent=85 // pred_region
          %s1543 = sld [smem:[#allocation4]]
          %s1544 = smul.f32 %s1543, 6.1035156e-05
          %s1545 = sld [smem:[#allocation4 + $0x1]]
          %s1546 = sadd.f32 %s1544, %s1545
          %s1547 = scalar_lea.smem [#allocation7], 0
          %1548 = sst [smem:[%s1547]] %s1546
        $region114: #{forward.1} parent=85 // pred_fallthru
          _
        // Predicated region
        $region115: #{forward.1} parent=85 // pred_check
          %p1549 = pneg %p221
        $region116: #{forward.1} parent=85 // pred_check_branch
          %1551 = sbr.rel (%p1549) target = $region118
        $region117: #{forward.1} parent=85 // pred_region
          %s1553 = ssub.s32 16, 16
          %1554 = vsyncadd [#allocation8], %s1553
          %1557 = dma.smem_to_hbm [#allocation7], 16, %s7, [#allocation8]
        $region118: #{forward.1} parent=85 // pred_fallthru
          _
        // Predicated region
        $region119: #{forward.1} parent=85 // pred_check
          %p1558 = pneg %p221
        $region120: #{forward.1} parent=85 // pred_check_branch
          %1560 = sbr.rel (%p1558) target = $region122
        $region121: #{forward.1} parent=85 // pred_region
          %1561 = dma.done [#allocation8], 16
        $region122: #{forward.1} parent=85 // pred_fallthru
          _
        %1562 = sfence
      $region86: #{forward.1} parent=5 // pred_fallthru
        _
      %p1563 = scmp.le.s32.totalorder 2, %s14
      // Predicated region
      $region123: #{forward.1} parent=5 // pred_check
        %p1564 = pneg %p1563
      $region124: #{forward.1} parent=5 // pred_check_branch
        %1566 = sbr.rel (%p1564) target = $region126
      $region125: #{forward.1} parent=5 // pred_region
        %s1567 = ssub.s32 %s14, 2
      $region126: #{forward.1} parent=5 // pred_fallthru
        _
    $region6: #{forward.1} parent=1 // loop_footer
      %s18 = sadd.s32 1, %s14
    $region7: #{forward.1} parent=1 // loop_footer_branch
      %13 = sbr.rel target = $region3
    $region8: #{forward.1} parent=1 // loop_exit
      _
    %1568 = vsyncpa [#allocation8], 1
    %s1569 = scalar_lea.sflag [#allocation8], 1
    %1570 = vsyncpa %s1569, 1

</llo_original>
